<compile_context>
chip_gen: v6e
topology: v6e:2x2x1
jax: 0.10.0
libtpu: 0.0.40
codegen_flags: <defaults>
</compile_context>

<pallas_src>
import functools

import jax
import jax.numpy as jnp
from jax.experimental import pallas as pl
from jax.experimental.pallas import tpu as pltpu


# ----------------------------------------------------------------------------
# Fused model kernel (built per static configuration)
# ----------------------------------------------------------------------------
def _make_fused_kernel(hnum, t_len, bp, hdim, compute_dtype):
    """Kernel closure for static (hnum, T, Bpad, H, matmul compute dtype)."""

    def kernel(*refs):
        # Input refs:
        #   [0] x_col   (T*Bp, 1)  time-major flattened input
        #   [1] w1_row  (1, L1)    hidden1 weight (row)        f32
        #   [2] b1_row  (1, L1)                                 f32
        #   [3+3l+0] w_ih_t (Din_l, 4H)  compute_dtype, i/f/o cols pre-scaled 0.5
        #   [3+3l+1] w_hh_t (H, 4H)      compute_dtype, i/f/o cols pre-scaled 0.5
        #   [3+3l+2] bias   (1, 4H)      f32 (b_ih+b_hh, i/f/o pre-scaled 0.5)
        #   [3+3*hnum]   wo_row (1, H)   f32
        #   [4+3*hnum]   bo     (1, 1)   f32
        # Output refs: out_col (T*Bp, 1), hn (hnum*Bp, H), cn (hnum*Bp, H)
        # Scratch:     y_sc (T*Bp, H) -- last layer's per-timestep hidden states
        x_ref, w1_ref, b1_ref = refs[0], refs[1], refs[2]
        lstm_refs = refs[3:3 + 3 * hnum]
        wo_ref, bo_ref = refs[3 + 3 * hnum], refs[4 + 3 * hnum]
        out_ref, hn_ref, cn_ref = refs[5 + 3 * hnum:8 + 3 * hnum]
        y_sc = refs[8 + 3 * hnum]

        # hidden1 + tanh: Linear(1, L1) is an outer product -> pure VPU.
        seq = jnp.tanh(x_ref[...] * w1_ref[...] + b1_ref[...])      # (T*Bp, L1) f32

        wih = [lstm_refs[3 * l + 0][...] for l in range(hnum)]       # (Din, 4H)
        whh = [lstm_refs[3 * l + 1][...] for l in range(hnum)]       # (H, 4H)
        bias = [lstm_refs[3 * l + 2][...] for l in range(hnum)]      # (1, 4H) f32

        # Layer-0 input projection hoisted over ALL timesteps: one MXU matmul.
        gx0 = jnp.dot(seq.astype(compute_dtype), wih[0],
                      preferred_element_type=jnp.float32) + bias[0]  # (T*Bp, 4H)

        zero_f = jnp.zeros((bp, hdim), jnp.float32)
        zero_c = jnp.zeros((bp, hdim), compute_dtype)
        h_f = [zero_f] * hnum        # f32 hidden state (fed to outputs / head)
        c_f = [zero_f] * hnum        # f32 cell state
        h_b = [zero_c] * hnum        # matmul-dtype hidden state (recurrent dot)
        prev_b = [zero_c] * hnum     # layer l's output from the previous step

        # Wavefront over layers: at step s, layer l handles timestep t = s - l.
        # All active layers inside one step depend only on the PREVIOUS step's
        # state, so their MXU/EUP/VPU chains are independent and overlap.
        for s in range(t_len + hnum - 1):
            new_h_f, new_h_b, new_c = {}, {}, {}
            for l in range(hnum):
                t = s - l
                if not (0 <= t < t_len):
                    continue
                if l == 0:
                    g = gx0[t * bp:(t + 1) * bp, :] + jnp.dot(
                        h_b[0], whh[0], preferred_element_type=jnp.float32)
                else:
                    # Per-timestep input projection on the h produced by layer
                    # l-1 at the previous wavefront step (same FLOPs as the
                    # hoisted form, keeps the layer chains independent).
                    g = (jnp.dot(prev_b[l - 1], wih[l],
                                 preferred_element_type=jnp.float32)
                         + jnp.dot(h_b[l], whh[l],
                                   preferred_element_type=jnp.float32)
                         + bias[l])
                # Single EUP tanh over all 4H lanes; i/f/o columns were
                # pre-halved in the weights, so sigmoid(x)=0.5*tanh(x/2)+0.5
                # is just one VPU affine afterwards.  Gate order: i, f, g, o.
                tg = jnp.tanh(g)
                sg = tg * 0.5 + 0.5
                i_g = sg[:, 0 * hdim:1 * hdim]
                f_g = sg[:, 1 * hdim:2 * hdim]
                g_g = tg[:, 2 * hdim:3 * hdim]
                o_g = sg[:, 3 * hdim:4 * hdim]
                c_new = f_g * c_f[l] + i_g * g_g
                h_new = o_g * jnp.tanh(c_new)
                new_c[l] = c_new
                new_h_f[l] = h_new
                new_h_b[l] = h_new.astype(compute_dtype)
                if l == hnum - 1:
                    # Sublane-aligned, lane-dense slab write (Bp multiple of 8).
                    y_sc[t * bp:(t + 1) * bp, :] = h_new
            # Commit AFTER all layers have consumed the previous step's state.
            for l, v in new_c.items():
                c_f[l] = v
            for l, v in new_h_f.items():
                h_f[l] = v
            for l, v in new_h_b.items():
                h_b[l] = v
                prev_b[l] = v

        # Final hidden / cell states (flat 2-D slabs -> dense stores).
        for l in range(hnum):
            hn_ref[l * bp:(l + 1) * bp, :] = h_f[l]
            cn_ref[l * bp:(l + 1) * bp, :] = c_f[l]

        # Output head Linear(H,1)+tanh: VPU broadcast-mul + XLU lane reduce
        # (no degenerate (.,H)x(H,1) MXU matmul), single store.
        # TODO(synk): for large B/T, emit a lane-dense (T, Bp) slab instead of
        # this (T*Bp, 1) column to avoid 1-lane masked stores.
        out_ref[...] = jnp.tanh(
            jnp.sum(y_sc[...] * wo_ref[...], axis=-1, keepdims=True)
            + bo_ref[...])

    return kernel


# ----------------------------------------------------------------------------
# Parameter init (deterministic, mirrors nn.Linear / nn.LSTM shapes)
# ----------------------------------------------------------------------------
def init_params(key, l1features, hdim, hnum):
    params = {}
    k = key

    def nxt():
        nonlocal k
        k, sub = jax.random.split(k)
        return sub

    scale = 0.1
    # hidden1: Linear(1, l1features)  -> store W^T (1, L1)
    params["w1_t"] = scale * jax.random.normal(nxt(), (1, l1features), jnp.float32)
    params["b1"] = scale * jax.random.normal(nxt(), (l1features,), jnp.float32)
    # LSTM layers (PyTorch gate order i, f, g, o; combined bias)
    params["lstm"] = []
    in_size = l1features
    for _ in range(hnum):
        w_ih = scale * jax.random.normal(nxt(), (4 * hdim, in_size), jnp.float32)
        w_hh = scale * jax.random.normal(nxt(), (4 * hdim, hdim), jnp.float32)
        b_ih = scale * jax.random.normal(nxt(), (4 * hdim,), jnp.float32)
        b_hh = scale * jax.random.normal(nxt(), (4 * hdim,), jnp.float32)
        params["lstm"].append(
            dict(w_ih_t=w_ih.T, w_hh_t=w_hh.T, bias=b_ih + b_hh))
        in_size = hdim
    # output: Linear(hdim, 1) -> store W^T (H, 1)
    params["wo_t"] = scale * jax.random.normal(nxt(), (hdim, 1), jnp.float32)
    params["bo"] = scale * jax.random.normal(nxt(), (1,), jnp.float32)
    return params


# ----------------------------------------------------------------------------
# Full forward (matches the PyTorch module semantics): one fused pallas_call
# ----------------------------------------------------------------------------
@functools.partial(
    jax.jit, static_argnames=("l1features", "hdim", "hnum", "use_bf16_matmul"))
def lstm_model_forward(x, params, *, l1features, hdim, hnum,
                       use_bf16_matmul=True):
    b, t_len, _ = x.shape
    bp = max(8, ((b + 7) // 8) * 8)      # pad batch to f32 sublane multiple
    n_rows = t_len * bp
    four_h = 4 * hdim
    cdtype = jnp.bfloat16 if use_bf16_matmul else jnp.float32

    # Time-major flatten + batch pad (tiny: B*T elements).
    x_tb = jnp.transpose(x[:, :, 0])                       # (T, B)
    x_tb = jnp.pad(x_tb, ((0, 0), (0, bp - b)))            # (T, Bp)
    x_col = x_tb.reshape(n_rows, 1)

    # sigmoid(x) = 0.5*tanh(x/2) + 0.5: fold the 0.5 into the i/f/o gate
    # columns of the weights and bias so the kernel needs one tanh per step.
    gate_scale = jnp.concatenate([
        jnp.full((hdim,), 0.5, jnp.float32),   # i
        jnp.full((hdim,), 0.5, jnp.float32),   # f
        jnp.ones((hdim,), jnp.float32),        # g (true tanh gate, unscaled)
        jnp.full((hdim,), 0.5, jnp.float32),   # o
    ])

    in_arrays = [x_col,
                 params["w1_t"],
                 params["b1"].reshape(1, l1features)]
    in_specs = [
        pl.BlockSpec((n_rows, 1), lambda i: (0, 0)),
        pl.BlockSpec((1, l1features), lambda i: (0, 0)),
        pl.BlockSpec((1, l1features), lambda i: (0, 0)),
    ]
    for layer in range(hnum):
        p = params["lstm"][layer]
        din = l1features if layer == 0 else hdim
        wih_prep = (p["w_ih_t"] * gate_scale[None, :]).astype(cdtype)
        whh_prep = (p["w_hh_t"] * gate_scale[None, :]).astype(cdtype)
        bias_prep = (p["bias"] * gate_scale).reshape(1, four_h)
        in_arrays += [wih_prep, whh_prep, bias_prep]
        in_specs += [
            pl.BlockSpec((din, four_h), lambda i: (0, 0)),
            pl.BlockSpec((hdim, four_h), lambda i: (0, 0)),
            pl.BlockSpec((1, four_h), lambda i: (0, 0)),
        ]
    in_arrays += [params["wo_t"].reshape(1, hdim), params["bo"].reshape(1, 1)]
    in_specs += [
        pl.BlockSpec((1, hdim), lambda i: (0, 0)),
        pl.BlockSpec((1, 1), lambda i: (0, 0)),
    ]

    out_shapes = (
        jax.ShapeDtypeStruct((n_rows, 1), jnp.float32),        # out (flat)
        jax.ShapeDtypeStruct((hnum * bp, hdim), jnp.float32),  # h_n (flat)
        jax.ShapeDtypeStruct((hnum * bp, hdim), jnp.float32),  # c_n (flat)
    )
    out_specs = [
        pl.BlockSpec((n_rows, 1), lambda i: (0, 0)),
        pl.BlockSpec((hnum * bp, hdim), lambda i: (0, 0)),
        pl.BlockSpec((hnum * bp, hdim), lambda i: (0, 0)),
    ]

    kernel = _make_fused_kernel(hnum, t_len, bp, hdim, cdtype)
    out_col, hn_flat, cn_flat = pl.pallas_call(
        kernel,
        out_shape=out_shapes,
        grid_spec=pltpu.PrefetchScalarGridSpec(
            num_scalar_prefetch=0,
            grid=(1,),
            in_specs=in_specs,
            out_specs=out_specs,
            scratch_shapes=[pltpu.VMEM((n_rows, hdim), jnp.float32)],
        ),
        compiler_params=pltpu.CompilerParams(
            dimension_semantics=("arbitrary",)),
    )(*in_arrays)

    # Strip batch padding; back to batch-first (tiny reshapes/transposes).
    out = out_col.reshape(t_len, bp)[:, :b].T[:, :, None]      # (B, T, 1)
    h_n = hn_flat.reshape(hnum, bp, hdim)[:, :b, :]            # (HNUM, B, H)
    c_n = cn_flat.reshape(hnum, bp, hdim)[:, :b, :]
    return out, (h_n, c_n)
    # TODO(synk): for large B on v7x, split the padded batch across the two
    # TensorCores (parallel grid axis / core_map); for large H/hnum, stack
    # per-layer weights and add a layer grid axis so VMEM holds ~2 layers; for
    # large T switch the unrolled time loop to lax.fori_loop(unroll=2..4).


# ----------------------------------------------------------------------------
# Pure-JAX reference (for correctness check only)
# ----------------------------------------------------------------------------
def reference_forward(x, params, l1features, hdim, hnum):
    b, t_len, _ = x.shape
    h1 = jnp.tanh(x @ params["w1_t"] + params["b1"])            # (B, T, L1)
    seq = h1
    h_list, c_list = [], []
    for layer in range(hnum):
        p = params["lstm"][layer]
        h = jnp.zeros((b, hdim), jnp.float32)
        c = jnp.zeros((b, hdim), jnp.float32)
        ys = []
        for t in range(t_len):
            gates = seq[:, t, :] @ p["w_ih_t"] + h @ p["w_hh_t"] + p["bias"]
            i_g = jax.nn.sigmoid(gates[:, 0 * hdim:1 * hdim])
            f_g = jax.nn.sigmoid(gates[:, 1 * hdim:2 * hdim])
            g_g = jnp.tanh(gates[:, 2 * hdim:3 * hdim])
            o_g = jax.nn.sigmoid(gates[:, 3 * hdim:4 * hdim])
            c = f_g * c + i_g * g_g
            h = o_g * jnp.tanh(c)
            ys.append(h)
        seq = jnp.stack(ys, axis=1)
        h_list.append(h)
        c_list.append(c)
    out = jnp.tanh(seq @ params["wo_t"] + params["bo"])
    return out, (jnp.stack(h_list, 0), jnp.stack(c_list, 0))


if __name__ == "__main__":
    B, T = 2, 8
    L1FEATURES, HDIM, HNUM = 16, 32, 2

    key = jax.random.PRNGKey(0)
    key, kx = jax.random.split(key)
    x = jax.random.normal(kx, (B, T, 1), jnp.float32)   # (batch, seq, 1)

    params = init_params(key, L1FEATURES, HDIM, HNUM)

    out, (h_n, c_n) = lstm_model_forward(
        x, params, l1features=L1FEATURES, hdim=HDIM, hnum=HNUM)
    jax.block_until_ready(out)
    jax.block_until_ready(h_n)
    jax.block_until_ready(c_n)

    ref_out, (ref_h, ref_c) = reference_forward(x, params, L1FEATURES, HDIM, HNUM)
    assert out.shape == (B, T, 1)
    assert h_n.shape == (HNUM, B, HDIM) and c_n.shape == (HNUM, B, HDIM)
    # bf16 MXU operands (f32 accumulation) -> relaxed tolerances vs f32 reference.
    assert jnp.allclose(out, ref_out, atol=2e-2, rtol=2e-2)
    assert jnp.allclose(h_n, ref_h, atol=2e-2, rtol=2e-2)
    assert jnp.allclose(c_n, ref_c, atol=2e-2, rtol=2e-2)

    print("KERNEL_OK")
</pallas_src>

<mosaic_0001>
module attributes {stable_mosaic.version = 11 : i64} {
  func.func @kernel(%arg0: i32, %arg1: memref<64x1xf32, #tpu.memory_space<vmem>>, %arg2: memref<1x16xf32, #tpu.memory_space<vmem>>, %arg3: memref<1x16xf32, #tpu.memory_space<vmem>>, %arg4: memref<16x128xbf16, #tpu.memory_space<vmem>>, %arg5: memref<32x128xbf16, #tpu.memory_space<vmem>>, %arg6: memref<1x128xf32, #tpu.memory_space<vmem>>, %arg7: memref<32x128xbf16, #tpu.memory_space<vmem>>, %arg8: memref<32x128xbf16, #tpu.memory_space<vmem>>, %arg9: memref<1x128xf32, #tpu.memory_space<vmem>>, %arg10: memref<1x32xf32, #tpu.memory_space<vmem>>, %arg11: memref<1x1xf32, #tpu.memory_space<vmem>>, %arg12: memref<64x1xf32, #tpu.memory_space<vmem>>, %arg13: memref<16x32xf32, #tpu.memory_space<vmem>>, %arg14: memref<16x32xf32, #tpu.memory_space<vmem>>, %arg15: memref<64x32xf32, #tpu.memory_space<vmem>>) attributes {dimension_semantics = [#tpu.dimension_semantics<arbitrary>], iteration_bounds = array<i64: 1>, scalar_prefetch = 0 : i64, scratch_operands = 1 : i64, tpu.core_type = #tpu.core_type<tc>, window_params = [{pipeline_mode = #tpu.pipeline_mode<synchronous>, transform_indices = @transform_0, window_bounds = array<i64: 64, 1>}, {pipeline_mode = #tpu.pipeline_mode<synchronous>, transform_indices = @transform_1, window_bounds = array<i64: 1, 16>}, {pipeline_mode = #tpu.pipeline_mode<synchronous>, transform_indices = @transform_2, window_bounds = array<i64: 1, 16>}, {pipeline_mode = #tpu.pipeline_mode<synchronous>, transform_indices = @transform_3, window_bounds = array<i64: 16, 128>}, {pipeline_mode = #tpu.pipeline_mode<synchronous>, transform_indices = @transform_4, window_bounds = array<i64: 32, 128>}, {pipeline_mode = #tpu.pipeline_mode<synchronous>, transform_indices = @transform_5, window_bounds = array<i64: 1, 128>}, {pipeline_mode = #tpu.pipeline_mode<synchronous>, transform_indices = @transform_6, window_bounds = array<i64: 32, 128>}, {pipeline_mode = #tpu.pipeline_mode<synchronous>, transform_indices = @transform_7, window_bounds = array<i64: 32, 128>}, {pipeline_mode = #tpu.pipeline_mode<synchronous>, transform_indices = @transform_8, window_bounds = array<i64: 1, 128>}, {pipeline_mode = #tpu.pipeline_mode<synchronous>, transform_indices = @transform_9, window_bounds = array<i64: 1, 32>}, {pipeline_mode = #tpu.pipeline_mode<synchronous>, transform_indices = @transform_10, window_bounds = array<i64: 1, 1>}, {pipeline_mode = #tpu.pipeline_mode<synchronous>, transform_indices = @transform_11, window_bounds = array<i64: 64, 1>}, {pipeline_mode = #tpu.pipeline_mode<synchronous>, transform_indices = @transform_12, window_bounds = array<i64: 16, 32>}, {pipeline_mode = #tpu.pipeline_mode<synchronous>, transform_indices = @transform_13, window_bounds = array<i64: 16, 32>}]} {
    %c0 = arith.constant 0 : index
    %c0_0 = arith.constant 0 : index
    %0 = vector.load %arg1[%c0, %c0_0] : memref<64x1xf32, #tpu.memory_space<vmem>>, vector<64x1xf32>
    %c0_1 = arith.constant 0 : index
    %c0_2 = arith.constant 0 : index
    %1 = vector.load %arg2[%c0_1, %c0_2] : memref<1x16xf32, #tpu.memory_space<vmem>>, vector<1x16xf32>
    %2 = vector.broadcast %0 : vector<64x1xf32> to vector<64x16xf32>
    %3 = vector.broadcast %1 : vector<1x16xf32> to vector<64x16xf32>
    %4 = arith.mulf %2, %3 : vector<64x16xf32>
    %c0_3 = arith.constant 0 : index
    %c0_4 = arith.constant 0 : index
    %5 = vector.load %arg3[%c0_3, %c0_4] : memref<1x16xf32, #tpu.memory_space<vmem>>, vector<1x16xf32>
    %6 = vector.broadcast %5 : vector<1x16xf32> to vector<64x16xf32>
    %7 = arith.addf %4, %6 : vector<64x16xf32>
    %8 = math.tanh %7 : vector<64x16xf32>
    %c0_5 = arith.constant 0 : index
    %c0_6 = arith.constant 0 : index
    %9 = vector.load %arg4[%c0_5, %c0_6] : memref<16x128xbf16, #tpu.memory_space<vmem>>, vector<16x128xbf16>
    %c0_7 = arith.constant 0 : index
    %c0_8 = arith.constant 0 : index
    %10 = vector.load %arg7[%c0_7, %c0_8] : memref<32x128xbf16, #tpu.memory_space<vmem>>, vector<32x128xbf16>
    %c0_9 = arith.constant 0 : index
    %c0_10 = arith.constant 0 : index
    %11 = vector.load %arg5[%c0_9, %c0_10] : memref<32x128xbf16, #tpu.memory_space<vmem>>, vector<32x128xbf16>
    %c0_11 = arith.constant 0 : index
    %c0_12 = arith.constant 0 : index
    %12 = vector.load %arg8[%c0_11, %c0_12] : memref<32x128xbf16, #tpu.memory_space<vmem>>, vector<32x128xbf16>
    %c0_13 = arith.constant 0 : index
    %c0_14 = arith.constant 0 : index
    %13 = vector.load %arg6[%c0_13, %c0_14] : memref<1x128xf32, #tpu.memory_space<vmem>>, vector<1x128xf32>
    %c0_15 = arith.constant 0 : index
    %c0_16 = arith.constant 0 : index
    %14 = vector.load %arg9[%c0_15, %c0_16] : memref<1x128xf32, #tpu.memory_space<vmem>>, vector<1x128xf32>
    %15 = arith.truncf %8 : vector<64x16xf32> to vector<64x16xbf16>
    %cst = arith.constant dense<0.000000e+00> : vector<64x128xf32>
    %16 = tpu.matmul %15, %9, %cst {dimension_numbers = #tpu.dot_dimension_numbers<[1], [0], [0], [1], [0, 0, 1, 1], [], []>} : vector<64x16xbf16>, vector<16x128xbf16>, vector<64x128xf32> -> vector<64x128xf32>
    %17 = vector.broadcast %13 : vector<1x128xf32> to vector<64x128xf32>
    %18 = arith.addf %16, %17 : vector<64x128xf32>
    %cst_17 = arith.constant 0.000000e+00 : f32
    %19 = vector.broadcast %cst_17 : f32 to vector<8x32xf32>
    %cst_18 = arith.constant 0.000000e+00 : bf16
    %20 = vector.broadcast %cst_18 : bf16 to vector<8x32xbf16>
    %21 = vector.extract_strided_slice %18 {offsets = [0, 0], sizes = [8, 128], strides = [1, 1]} : vector<64x128xf32> to vector<8x128xf32>
    %cst_19 = arith.constant dense<0.000000e+00> : vector<8x128xf32>
    %22 = tpu.matmul %20, %11, %cst_19 {dimension_numbers = #tpu.dot_dimension_numbers<[1], [0], [0], [1], [0, 0, 1, 1], [], []>} : vector<8x32xbf16>, vector<32x128xbf16>, vector<8x128xf32> -> vector<8x128xf32>
    %23 = arith.addf %21, %22 : vector<8x128xf32>
    %24 = math.tanh %23 : vector<8x128xf32>
    %cst_20 = arith.constant 5.000000e-01 : f32
    %25 = vector.broadcast %cst_20 : f32 to vector<8x128xf32>
    %26 = arith.mulf %24, %25 : vector<8x128xf32>
    %cst_21 = arith.constant 5.000000e-01 : f32
    %27 = vector.broadcast %cst_21 : f32 to vector<8x128xf32>
    %28 = arith.addf %26, %27 : vector<8x128xf32>
    %29 = vector.extract_strided_slice %28 {offsets = [0, 0], sizes = [8, 32], strides = [1, 1]} : vector<8x128xf32> to vector<8x32xf32>
    %30 = vector.extract_strided_slice %28 {offsets = [0, 32], sizes = [8, 32], strides = [1, 1]} : vector<8x128xf32> to vector<8x32xf32>
    %31 = vector.extract_strided_slice %24 {offsets = [0, 64], sizes = [8, 32], strides = [1, 1]} : vector<8x128xf32> to vector<8x32xf32>
    %32 = vector.extract_strided_slice %28 {offsets = [0, 96], sizes = [8, 32], strides = [1, 1]} : vector<8x128xf32> to vector<8x32xf32>
    %33 = arith.mulf %30, %19 : vector<8x32xf32>
    %34 = arith.mulf %29, %31 : vector<8x32xf32>
    %35 = arith.addf %33, %34 : vector<8x32xf32>
    %36 = math.tanh %35 : vector<8x32xf32>
    %37 = arith.mulf %32, %36 : vector<8x32xf32>
    %38 = arith.truncf %37 : vector<8x32xf32> to vector<8x32xbf16>
    %39 = vector.extract_strided_slice %18 {offsets = [8, 0], sizes = [8, 128], strides = [1, 1]} : vector<64x128xf32> to vector<8x128xf32>
    %cst_22 = arith.constant dense<0.000000e+00> : vector<8x128xf32>
    %40 = tpu.matmul %38, %11, %cst_22 {dimension_numbers = #tpu.dot_dimension_numbers<[1], [0], [0], [1], [0, 0, 1, 1], [], []>} : vector<8x32xbf16>, vector<32x128xbf16>, vector<8x128xf32> -> vector<8x128xf32>
    %41 = arith.addf %39, %40 : vector<8x128xf32>
    %42 = math.tanh %41 : vector<8x128xf32>
    %cst_23 = arith.constant 5.000000e-01 : f32
    %43 = vector.broadcast %cst_23 : f32 to vector<8x128xf32>
    %44 = arith.mulf %42, %43 : vector<8x128xf32>
    %cst_24 = arith.constant 5.000000e-01 : f32
    %45 = vector.broadcast %cst_24 : f32 to vector<8x128xf32>
    %46 = arith.addf %44, %45 : vector<8x128xf32>
    %47 = vector.extract_strided_slice %46 {offsets = [0, 0], sizes = [8, 32], strides = [1, 1]} : vector<8x128xf32> to vector<8x32xf32>
    %48 = vector.extract_strided_slice %46 {offsets = [0, 32], sizes = [8, 32], strides = [1, 1]} : vector<8x128xf32> to vector<8x32xf32>
    %49 = vector.extract_strided_slice %42 {offsets = [0, 64], sizes = [8, 32], strides = [1, 1]} : vector<8x128xf32> to vector<8x32xf32>
    %50 = vector.extract_strided_slice %46 {offsets = [0, 96], sizes = [8, 32], strides = [1, 1]} : vector<8x128xf32> to vector<8x32xf32>
    %51 = arith.mulf %48, %35 : vector<8x32xf32>
    %52 = arith.mulf %47, %49 : vector<8x32xf32>
    %53 = arith.addf %51, %52 : vector<8x32xf32>
    %54 = math.tanh %53 : vector<8x32xf32>
    %55 = arith.mulf %50, %54 : vector<8x32xf32>
    %56 = arith.truncf %55 : vector<8x32xf32> to vector<8x32xbf16>
    %cst_25 = arith.constant dense<0.000000e+00> : vector<8x128xf32>
    %57 = tpu.matmul %38, %10, %cst_25 {dimension_numbers = #tpu.dot_dimension_numbers<[1], [0], [0], [1], [0, 0, 1, 1], [], []>} : vector<8x32xbf16>, vector<32x128xbf16>, vector<8x128xf32> -> vector<8x128xf32>
    %cst_26 = arith.constant dense<0.000000e+00> : vector<8x128xf32>
    %58 = tpu.matmul %20, %12, %cst_26 {dimension_numbers = #tpu.dot_dimension_numbers<[1], [0], [0], [1], [0, 0, 1, 1], [], []>} : vector<8x32xbf16>, vector<32x128xbf16>, vector<8x128xf32> -> vector<8x128xf32>
    %59 = arith.addf %57, %58 : vector<8x128xf32>
    %60 = vector.broadcast %14 : vector<1x128xf32> to vector<8x128xf32>
    %61 = arith.addf %59, %60 : vector<8x128xf32>
    %62 = math.tanh %61 : vector<8x128xf32>
    %cst_27 = arith.constant 5.000000e-01 : f32
    %63 = vector.broadcast %cst_27 : f32 to vector<8x128xf32>
    %64 = arith.mulf %62, %63 : vector<8x128xf32>
    %cst_28 = arith.constant 5.000000e-01 : f32
    %65 = vector.broadcast %cst_28 : f32 to vector<8x128xf32>
    %66 = arith.addf %64, %65 : vector<8x128xf32>
    %67 = vector.extract_strided_slice %66 {offsets = [0, 0], sizes = [8, 32], strides = [1, 1]} : vector<8x128xf32> to vector<8x32xf32>
    %68 = vector.extract_strided_slice %66 {offsets = [0, 32], sizes = [8, 32], strides = [1, 1]} : vector<8x128xf32> to vector<8x32xf32>
    %69 = vector.extract_strided_slice %62 {offsets = [0, 64], sizes = [8, 32], strides = [1, 1]} : vector<8x128xf32> to vector<8x32xf32>
    %70 = vector.extract_strided_slice %66 {offsets = [0, 96], sizes = [8, 32], strides = [1, 1]} : vector<8x128xf32> to vector<8x32xf32>
    %71 = arith.mulf %68, %19 : vector<8x32xf32>
    %72 = arith.mulf %67, %69 : vector<8x32xf32>
    %73 = arith.addf %71, %72 : vector<8x32xf32>
    %74 = math.tanh %73 : vector<8x32xf32>
    %75 = arith.mulf %70, %74 : vector<8x32xf32>
    %76 = arith.truncf %75 : vector<8x32xf32> to vector<8x32xbf16>
    %c0_29 = arith.constant 0 : index
    %c0_30 = arith.constant 0 : index
    %77 = vector.load %arg15[%c0_29, %c0_30] : memref<64x32xf32, #tpu.memory_space<vmem>>, vector<8x32xf32>
    tpu.vector_store %arg15[%c0_29, %c0_30], %75 {strides = array<i32>} : memref<64x32xf32, #tpu.memory_space<vmem>>, vector<8x32xf32>,
    %78 = vector.extract_strided_slice %18 {offsets = [16, 0], sizes = [8, 128], strides = [1, 1]} : vector<64x128xf32> to vector<8x128xf32>
    %cst_31 = arith.constant dense<0.000000e+00> : vector<8x128xf32>
    %79 = tpu.matmul %56, %11, %cst_31 {dimension_numbers = #tpu.dot_dimension_numbers<[1], [0], [0], [1], [0, 0, 1, 1], [], []>} : vector<8x32xbf16>, vector<32x128xbf16>, vector<8x128xf32> -> vector<8x128xf32>
    %80 = arith.addf %78, %79 : vector<8x128xf32>
    %81 = math.tanh %80 : vector<8x128xf32>
    %cst_32 = arith.constant 5.000000e-01 : f32
    %82 = vector.broadcast %cst_32 : f32 to vector<8x128xf32>
    %83 = arith.mulf %81, %82 : vector<8x128xf32>
    %cst_33 = arith.constant 5.000000e-01 : f32
    %84 = vector.broadcast %cst_33 : f32 to vector<8x128xf32>
    %85 = arith.addf %83, %84 : vector<8x128xf32>
    %86 = vector.extract_strided_slice %85 {offsets = [0, 0], sizes = [8, 32], strides = [1, 1]} : vector<8x128xf32> to vector<8x32xf32>
    %87 = vector.extract_strided_slice %85 {offsets = [0, 32], sizes = [8, 32], strides = [1, 1]} : vector<8x128xf32> to vector<8x32xf32>
    %88 = vector.extract_strided_slice %81 {offsets = [0, 64], sizes = [8, 32], strides = [1, 1]} : vector<8x128xf32> to vector<8x32xf32>
    %89 = vector.extract_strided_slice %85 {offsets = [0, 96], sizes = [8, 32], strides = [1, 1]} : vector<8x128xf32> to vector<8x32xf32>
    %90 = arith.mulf %87, %53 : vector<8x32xf32>
    %91 = arith.mulf %86, %88 : vector<8x32xf32>
    %92 = arith.addf %90, %91 : vector<8x32xf32>
    %93 = math.tanh %92 : vector<8x32xf32>
    %94 = arith.mulf %89, %93 : vector<8x32xf32>
    %95 = arith.truncf %94 : vector<8x32xf32> to vector<8x32xbf16>
    %cst_34 = arith.constant dense<0.000000e+00> : vector<8x128xf32>
    %96 = tpu.matmul %56, %10, %cst_34 {dimension_numbers = #tpu.dot_dimension_numbers<[1], [0], [0], [1], [0, 0, 1, 1], [], []>} : vector<8x32xbf16>, vector<32x128xbf16>, vector<8x128xf32> -> vector<8x128xf32>
    %cst_35 = arith.constant dense<0.000000e+00> : vector<8x128xf32>
    %97 = tpu.matmul %76, %12, %cst_35 {dimension_numbers = #tpu.dot_dimension_numbers<[1], [0], [0], [1], [0, 0, 1, 1], [], []>} : vector<8x32xbf16>, vector<32x128xbf16>, vector<8x128xf32> -> vector<8x128xf32>
    %98 = arith.addf %96, %97 : vector<8x128xf32>
    %99 = vector.broadcast %14 : vector<1x128xf32> to vector<8x128xf32>
    %100 = arith.addf %98, %99 : vector<8x128xf32>
    %101 = math.tanh %100 : vector<8x128xf32>
    %cst_36 = arith.constant 5.000000e-01 : f32
    %102 = vector.broadcast %cst_36 : f32 to vector<8x128xf32>
    %103 = arith.mulf %101, %102 : vector<8x128xf32>
    %cst_37 = arith.constant 5.000000e-01 : f32
    %104 = vector.broadcast %cst_37 : f32 to vector<8x128xf32>
    %105 = arith.addf %103, %104 : vector<8x128xf32>
    %106 = vector.extract_strided_slice %105 {offsets = [0, 0], sizes = [8, 32], strides = [1, 1]} : vector<8x128xf32> to vector<8x32xf32>
    %107 = vector.extract_strided_slice %105 {offsets = [0, 32], sizes = [8, 32], strides = [1, 1]} : vector<8x128xf32> to vector<8x32xf32>
    %108 = vector.extract_strided_slice %101 {offsets = [0, 64], sizes = [8, 32], strides = [1, 1]} : vector<8x128xf32> to vector<8x32xf32>
    %109 = vector.extract_strided_slice %105 {offsets = [0, 96], sizes = [8, 32], strides = [1, 1]} : vector<8x128xf32> to vector<8x32xf32>
    %110 = arith.mulf %107, %73 : vector<8x32xf32>
    %111 = arith.mulf %106, %108 : vector<8x32xf32>
    %112 = arith.addf %110, %111 : vector<8x32xf32>
    %113 = math.tanh %112 : vector<8x32xf32>
    %114 = arith.mulf %109, %113 : vector<8x32xf32>
    %115 = arith.truncf %114 : vector<8x32xf32> to vector<8x32xbf16>
    %c8 = arith.constant 8 : index
    %c0_38 = arith.constant 0 : index
    %116 = vector.load %arg15[%c8, %c0_38] : memref<64x32xf32, #tpu.memory_space<vmem>>, vector<8x32xf32>
    tpu.vector_store %arg15[%c8, %c0_38], %114 {strides = array<i32>} : memref<64x32xf32, #tpu.memory_space<vmem>>, vector<8x32xf32>,
    %117 = vector.extract_strided_slice %18 {offsets = [24, 0], sizes = [8, 128], strides = [1, 1]} : vector<64x128xf32> to vector<8x128xf32>
    %cst_39 = arith.constant dense<0.000000e+00> : vector<8x128xf32>
    %118 = tpu.matmul %95, %11, %cst_39 {dimension_numbers = #tpu.dot_dimension_numbers<[1], [0], [0], [1], [0, 0, 1, 1], [], []>} : vector<8x32xbf16>, vector<32x128xbf16>, vector<8x128xf32> -> vector<8x128xf32>
    %119 = arith.addf %117, %118 : vector<8x128xf32>
    %120 = math.tanh %119 : vector<8x128xf32>
    %cst_40 = arith.constant 5.000000e-01 : f32
    %121 = vector.broadcast %cst_40 : f32 to vector<8x128xf32>
    %122 = arith.mulf %120, %121 : vector<8x128xf32>
    %cst_41 = arith.constant 5.000000e-01 : f32
    %123 = vector.broadcast %cst_41 : f32 to vector<8x128xf32>
    %124 = arith.addf %122, %123 : vector<8x128xf32>
    %125 = vector.extract_strided_slice %124 {offsets = [0, 0], sizes = [8, 32], strides = [1, 1]} : vector<8x128xf32> to vector<8x32xf32>
    %126 = vector.extract_strided_slice %124 {offsets = [0, 32], sizes = [8, 32], strides = [1, 1]} : vector<8x128xf32> to vector<8x32xf32>
    %127 = vector.extract_strided_slice %120 {offsets = [0, 64], sizes = [8, 32], strides = [1, 1]} : vector<8x128xf32> to vector<8x32xf32>
    %128 = vector.extract_strided_slice %124 {offsets = [0, 96], sizes = [8, 32], strides = [1, 1]} : vector<8x128xf32> to vector<8x32xf32>
    %129 = arith.mulf %126, %92 : vector<8x32xf32>
    %130 = arith.mulf %125, %127 : vector<8x32xf32>
    %131 = arith.addf %129, %130 : vector<8x32xf32>
    %132 = math.tanh %131 : vector<8x32xf32>
    %133 = arith.mulf %128, %132 : vector<8x32xf32>
    %134 = arith.truncf %133 : vector<8x32xf32> to vector<8x32xbf16>
    %cst_42 = arith.constant dense<0.000000e+00> : vector<8x128xf32>
    %135 = tpu.matmul %95, %10, %cst_42 {dimension_numbers = #tpu.dot_dimension_numbers<[1], [0], [0], [1], [0, 0, 1, 1], [], []>} : vector<8x32xbf16>, vector<32x128xbf16>, vector<8x128xf32> -> vector<8x128xf32>
    %cst_43 = arith.constant dense<0.000000e+00> : vector<8x128xf32>
    %136 = tpu.matmul %115, %12, %cst_43 {dimension_numbers = #tpu.dot_dimension_numbers<[1], [0], [0], [1], [0, 0, 1, 1], [], []>} : vector<8x32xbf16>, vector<32x128xbf16>, vector<8x128xf32> -> vector<8x128xf32>
    %137 = arith.addf %135, %136 : vector<8x128xf32>
    %138 = vector.broadcast %14 : vector<1x128xf32> to vector<8x128xf32>
    %139 = arith.addf %137, %138 : vector<8x128xf32>
    %140 = math.tanh %139 : vector<8x128xf32>
    %cst_44 = arith.constant 5.000000e-01 : f32
    %141 = vector.broadcast %cst_44 : f32 to vector<8x128xf32>
    %142 = arith.mulf %140, %141 : vector<8x128xf32>
    %cst_45 = arith.constant 5.000000e-01 : f32
    %143 = vector.broadcast %cst_45 : f32 to vector<8x128xf32>
    %144 = arith.addf %142, %143 : vector<8x128xf32>
    %145 = vector.extract_strided_slice %144 {offsets = [0, 0], sizes = [8, 32], strides = [1, 1]} : vector<8x128xf32> to vector<8x32xf32>
    %146 = vector.extract_strided_slice %144 {offsets = [0, 32], sizes = [8, 32], strides = [1, 1]} : vector<8x128xf32> to vector<8x32xf32>
    %147 = vector.extract_strided_slice %140 {offsets = [0, 64], sizes = [8, 32], strides = [1, 1]} : vector<8x128xf32> to vector<8x32xf32>
    %148 = vector.extract_strided_slice %144 {offsets = [0, 96], sizes = [8, 32], strides = [1, 1]} : vector<8x128xf32> to vector<8x32xf32>
    %149 = arith.mulf %146, %112 : vector<8x32xf32>
    %150 = arith.mulf %145, %147 : vector<8x32xf32>
    %151 = arith.addf %149, %150 : vector<8x32xf32>
    %152 = math.tanh %151 : vector<8x32xf32>
    %153 = arith.mulf %148, %152 : vector<8x32xf32>
    %154 = arith.truncf %153 : vector<8x32xf32> to vector<8x32xbf16>
    %c16 = arith.constant 16 : index
    %c0_46 = arith.constant 0 : index
    %155 = vector.load %arg15[%c16, %c0_46] : memref<64x32xf32, #tpu.memory_space<vmem>>, vector<8x32xf32>
    tpu.vector_store %arg15[%c16, %c0_46], %153 {strides = array<i32>} : memref<64x32xf32, #tpu.memory_space<vmem>>, vector<8x32xf32>,
    %156 = vector.extract_strided_slice %18 {offsets = [32, 0], sizes = [8, 128], strides = [1, 1]} : vector<64x128xf32> to vector<8x128xf32>
    %cst_47 = arith.constant dense<0.000000e+00> : vector<8x128xf32>
    %157 = tpu.matmul %134, %11, %cst_47 {dimension_numbers = #tpu.dot_dimension_numbers<[1], [0], [0], [1], [0, 0, 1, 1], [], []>} : vector<8x32xbf16>, vector<32x128xbf16>, vector<8x128xf32> -> vector<8x128xf32>
    %158 = arith.addf %156, %157 : vector<8x128xf32>
    %159 = math.tanh %158 : vector<8x128xf32>
    %cst_48 = arith.constant 5.000000e-01 : f32
    %160 = vector.broadcast %cst_48 : f32 to vector<8x128xf32>
    %161 = arith.mulf %159, %160 : vector<8x128xf32>
    %cst_49 = arith.constant 5.000000e-01 : f32
    %162 = vector.broadcast %cst_49 : f32 to vector<8x128xf32>
    %163 = arith.addf %161, %162 : vector<8x128xf32>
    %164 = vector.extract_strided_slice %163 {offsets = [0, 0], sizes = [8, 32], strides = [1, 1]} : vector<8x128xf32> to vector<8x32xf32>
    %165 = vector.extract_strided_slice %163 {offsets = [0, 32], sizes = [8, 32], strides = [1, 1]} : vector<8x128xf32> to vector<8x32xf32>
    %166 = vector.extract_strided_slice %159 {offsets = [0, 64], sizes = [8, 32], strides = [1, 1]} : vector<8x128xf32> to vector<8x32xf32>
    %167 = vector.extract_strided_slice %163 {offsets = [0, 96], sizes = [8, 32], strides = [1, 1]} : vector<8x128xf32> to vector<8x32xf32>
    %168 = arith.mulf %165, %131 : vector<8x32xf32>
    %169 = arith.mulf %164, %166 : vector<8x32xf32>
    %170 = arith.addf %168, %169 : vector<8x32xf32>
    %171 = math.tanh %170 : vector<8x32xf32>
    %172 = arith.mulf %167, %171 : vector<8x32xf32>
    %173 = arith.truncf %172 : vector<8x32xf32> to vector<8x32xbf16>
    %cst_50 = arith.constant dense<0.000000e+00> : vector<8x128xf32>
    %174 = tpu.matmul %134, %10, %cst_50 {dimension_numbers = #tpu.dot_dimension_numbers<[1], [0], [0], [1], [0, 0, 1, 1], [], []>} : vector<8x32xbf16>, vector<32x128xbf16>, vector<8x128xf32> -> vector<8x128xf32>
    %cst_51 = arith.constant dense<0.000000e+00> : vector<8x128xf32>
    %175 = tpu.matmul %154, %12, %cst_51 {dimension_numbers = #tpu.dot_dimension_numbers<[1], [0], [0], [1], [0, 0, 1, 1], [], []>} : vector<8x32xbf16>, vector<32x128xbf16>, vector<8x128xf32> -> vector<8x128xf32>
    %176 = arith.addf %174, %175 : vector<8x128xf32>
    %177 = vector.broadcast %14 : vector<1x128xf32> to vector<8x128xf32>
    %178 = arith.addf %176, %177 : vector<8x128xf32>
    %179 = math.tanh %178 : vector<8x128xf32>
    %cst_52 = arith.constant 5.000000e-01 : f32
    %180 = vector.broadcast %cst_52 : f32 to vector<8x128xf32>
    %181 = arith.mulf %179, %180 : vector<8x128xf32>
    %cst_53 = arith.constant 5.000000e-01 : f32
    %182 = vector.broadcast %cst_53 : f32 to vector<8x128xf32>
    %183 = arith.addf %181, %182 : vector<8x128xf32>
    %184 = vector.extract_strided_slice %183 {offsets = [0, 0], sizes = [8, 32], strides = [1, 1]} : vector<8x128xf32> to vector<8x32xf32>
    %185 = vector.extract_strided_slice %183 {offsets = [0, 32], sizes = [8, 32], strides = [1, 1]} : vector<8x128xf32> to vector<8x32xf32>
    %186 = vector.extract_strided_slice %179 {offsets = [0, 64], sizes = [8, 32], strides = [1, 1]} : vector<8x128xf32> to vector<8x32xf32>
    %187 = vector.extract_strided_slice %183 {offsets = [0, 96], sizes = [8, 32], strides = [1, 1]} : vector<8x128xf32> to vector<8x32xf32>
    %188 = arith.mulf %185, %151 : vector<8x32xf32>
    %189 = arith.mulf %184, %186 : vector<8x32xf32>
    %190 = arith.addf %188, %189 : vector<8x32xf32>
    %191 = math.tanh %190 : vector<8x32xf32>
    %192 = arith.mulf %187, %191 : vector<8x32xf32>
    %193 = arith.truncf %192 : vector<8x32xf32> to vector<8x32xbf16>
    %c24 = arith.constant 24 : index
    %c0_54 = arith.constant 0 : index
    %194 = vector.load %arg15[%c24, %c0_54] : memref<64x32xf32, #tpu.memory_space<vmem>>, vector<8x32xf32>
    tpu.vector_store %arg15[%c24, %c0_54], %192 {strides = array<i32>} : memref<64x32xf32, #tpu.memory_space<vmem>>, vector<8x32xf32>,
    %195 = vector.extract_strided_slice %18 {offsets = [40, 0], sizes = [8, 128], strides = [1, 1]} : vector<64x128xf32> to vector<8x128xf32>
    %cst_55 = arith.constant dense<0.000000e+00> : vector<8x128xf32>
    %196 = tpu.matmul %173, %11, %cst_55 {dimension_numbers = #tpu.dot_dimension_numbers<[1], [0], [0], [1], [0, 0, 1, 1], [], []>} : vector<8x32xbf16>, vector<32x128xbf16>, vector<8x128xf32> -> vector<8x128xf32>
    %197 = arith.addf %195, %196 : vector<8x128xf32>
    %198 = math.tanh %197 : vector<8x128xf32>
    %cst_56 = arith.constant 5.000000e-01 : f32
    %199 = vector.broadcast %cst_56 : f32 to vector<8x128xf32>
    %200 = arith.mulf %198, %199 : vector<8x128xf32>
    %cst_57 = arith.constant 5.000000e-01 : f32
    %201 = vector.broadcast %cst_57 : f32 to vector<8x128xf32>
    %202 = arith.addf %200, %201 : vector<8x128xf32>
    %203 = vector.extract_strided_slice %202 {offsets = [0, 0], sizes = [8, 32], strides = [1, 1]} : vector<8x128xf32> to vector<8x32xf32>
    %204 = vector.extract_strided_slice %202 {offsets = [0, 32], sizes = [8, 32], strides = [1, 1]} : vector<8x128xf32> to vector<8x32xf32>
    %205 = vector.extract_strided_slice %198 {offsets = [0, 64], sizes = [8, 32], strides = [1, 1]} : vector<8x128xf32> to vector<8x32xf32>
    %206 = vector.extract_strided_slice %202 {offsets = [0, 96], sizes = [8, 32], strides = [1, 1]} : vector<8x128xf32> to vector<8x32xf32>
    %207 = arith.mulf %204, %170 : vector<8x32xf32>
    %208 = arith.mulf %203, %205 : vector<8x32xf32>
    %209 = arith.addf %207, %208 : vector<8x32xf32>
    %210 = math.tanh %209 : vector<8x32xf32>
    %211 = arith.mulf %206, %210 : vector<8x32xf32>
    %212 = arith.truncf %211 : vector<8x32xf32> to vector<8x32xbf16>
    %cst_58 = arith.constant dense<0.000000e+00> : vector<8x128xf32>
    %213 = tpu.matmul %173, %10, %cst_58 {dimension_numbers = #tpu.dot_dimension_numbers<[1], [0], [0], [1], [0, 0, 1, 1], [], []>} : vector<8x32xbf16>, vector<32x128xbf16>, vector<8x128xf32> -> vector<8x128xf32>
    %cst_59 = arith.constant dense<0.000000e+00> : vector<8x128xf32>
    %214 = tpu.matmul %193, %12, %cst_59 {dimension_numbers = #tpu.dot_dimension_numbers<[1], [0], [0], [1], [0, 0, 1, 1], [], []>} : vector<8x32xbf16>, vector<32x128xbf16>, vector<8x128xf32> -> vector<8x128xf32>
    %215 = arith.addf %213, %214 : vector<8x128xf32>
    %216 = vector.broadcast %14 : vector<1x128xf32> to vector<8x128xf32>
    %217 = arith.addf %215, %216 : vector<8x128xf32>
    %218 = math.tanh %217 : vector<8x128xf32>
    %cst_60 = arith.constant 5.000000e-01 : f32
    %219 = vector.broadcast %cst_60 : f32 to vector<8x128xf32>
    %220 = arith.mulf %218, %219 : vector<8x128xf32>
    %cst_61 = arith.constant 5.000000e-01 : f32
    %221 = vector.broadcast %cst_61 : f32 to vector<8x128xf32>
    %222 = arith.addf %220, %221 : vector<8x128xf32>
    %223 = vector.extract_strided_slice %222 {offsets = [0, 0], sizes = [8, 32], strides = [1, 1]} : vector<8x128xf32> to vector<8x32xf32>
    %224 = vector.extract_strided_slice %222 {offsets = [0, 32], sizes = [8, 32], strides = [1, 1]} : vector<8x128xf32> to vector<8x32xf32>
    %225 = vector.extract_strided_slice %218 {offsets = [0, 64], sizes = [8, 32], strides = [1, 1]} : vector<8x128xf32> to vector<8x32xf32>
    %226 = vector.extract_strided_slice %222 {offsets = [0, 96], sizes = [8, 32], strides = [1, 1]} : vector<8x128xf32> to vector<8x32xf32>
    %227 = arith.mulf %224, %190 : vector<8x32xf32>
    %228 = arith.mulf %223, %225 : vector<8x32xf32>
    %229 = arith.addf %227, %228 : vector<8x32xf32>
    %230 = math.tanh %229 : vector<8x32xf32>
    %231 = arith.mulf %226, %230 : vector<8x32xf32>
    %232 = arith.truncf %231 : vector<8x32xf32> to vector<8x32xbf16>
    %c32 = arith.constant 32 : index
    %c0_62 = arith.constant 0 : index
    %233 = vector.load %arg15[%c32, %c0_62] : memref<64x32xf32, #tpu.memory_space<vmem>>, vector<8x32xf32>
    tpu.vector_store %arg15[%c32, %c0_62], %231 {strides = array<i32>} : memref<64x32xf32, #tpu.memory_space<vmem>>, vector<8x32xf32>,
    %234 = vector.extract_strided_slice %18 {offsets = [48, 0], sizes = [8, 128], strides = [1, 1]} : vector<64x128xf32> to vector<8x128xf32>
    %cst_63 = arith.constant dense<0.000000e+00> : vector<8x128xf32>
    %235 = tpu.matmul %212, %11, %cst_63 {dimension_numbers = #tpu.dot_dimension_numbers<[1], [0], [0], [1], [0, 0, 1, 1], [], []>} : vector<8x32xbf16>, vector<32x128xbf16>, vector<8x128xf32> -> vector<8x128xf32>
    %236 = arith.addf %234, %235 : vector<8x128xf32>
    %237 = math.tanh %236 : vector<8x128xf32>
    %cst_64 = arith.constant 5.000000e-01 : f32
    %238 = vector.broadcast %cst_64 : f32 to vector<8x128xf32>
    %239 = arith.mulf %237, %238 : vector<8x128xf32>
    %cst_65 = arith.constant 5.000000e-01 : f32
    %240 = vector.broadcast %cst_65 : f32 to vector<8x128xf32>
    %241 = arith.addf %239, %240 : vector<8x128xf32>
    %242 = vector.extract_strided_slice %241 {offsets = [0, 0], sizes = [8, 32], strides = [1, 1]} : vector<8x128xf32> to vector<8x32xf32>
    %243 = vector.extract_strided_slice %241 {offsets = [0, 32], sizes = [8, 32], strides = [1, 1]} : vector<8x128xf32> to vector<8x32xf32>
    %244 = vector.extract_strided_slice %237 {offsets = [0, 64], sizes = [8, 32], strides = [1, 1]} : vector<8x128xf32> to vector<8x32xf32>
    %245 = vector.extract_strided_slice %241 {offsets = [0, 96], sizes = [8, 32], strides = [1, 1]} : vector<8x128xf32> to vector<8x32xf32>
    %246 = arith.mulf %243, %209 : vector<8x32xf32>
    %247 = arith.mulf %242, %244 : vector<8x32xf32>
    %248 = arith.addf %246, %247 : vector<8x32xf32>
    %249 = math.tanh %248 : vector<8x32xf32>
    %250 = arith.mulf %245, %249 : vector<8x32xf32>
    %251 = arith.truncf %250 : vector<8x32xf32> to vector<8x32xbf16>
    %cst_66 = arith.constant dense<0.000000e+00> : vector<8x128xf32>
    %252 = tpu.matmul %212, %10, %cst_66 {dimension_numbers = #tpu.dot_dimension_numbers<[1], [0], [0], [1], [0, 0, 1, 1], [], []>} : vector<8x32xbf16>, vector<32x128xbf16>, vector<8x128xf32> -> vector<8x128xf32>
    %cst_67 = arith.constant dense<0.000000e+00> : vector<8x128xf32>
    %253 = tpu.matmul %232, %12, %cst_67 {dimension_numbers = #tpu.dot_dimension_numbers<[1], [0], [0], [1], [0, 0, 1, 1], [], []>} : vector<8x32xbf16>, vector<32x128xbf16>, vector<8x128xf32> -> vector<8x128xf32>
    %254 = arith.addf %252, %253 : vector<8x128xf32>
    %255 = vector.broadcast %14 : vector<1x128xf32> to vector<8x128xf32>
    %256 = arith.addf %254, %255 : vector<8x128xf32>
    %257 = math.tanh %256 : vector<8x128xf32>
    %cst_68 = arith.constant 5.000000e-01 : f32
    %258 = vector.broadcast %cst_68 : f32 to vector<8x128xf32>
    %259 = arith.mulf %257, %258 : vector<8x128xf32>
    %cst_69 = arith.constant 5.000000e-01 : f32
    %260 = vector.broadcast %cst_69 : f32 to vector<8x128xf32>
    %261 = arith.addf %259, %260 : vector<8x128xf32>
    %262 = vector.extract_strided_slice %261 {offsets = [0, 0], sizes = [8, 32], strides = [1, 1]} : vector<8x128xf32> to vector<8x32xf32>
    %263 = vector.extract_strided_slice %261 {offsets = [0, 32], sizes = [8, 32], strides = [1, 1]} : vector<8x128xf32> to vector<8x32xf32>
    %264 = vector.extract_strided_slice %257 {offsets = [0, 64], sizes = [8, 32], strides = [1, 1]} : vector<8x128xf32> to vector<8x32xf32>
    %265 = vector.extract_strided_slice %261 {offsets = [0, 96], sizes = [8, 32], strides = [1, 1]} : vector<8x128xf32> to vector<8x32xf32>
    %266 = arith.mulf %263, %229 : vector<8x32xf32>
    %267 = arith.mulf %262, %264 : vector<8x32xf32>
    %268 = arith.addf %266, %267 : vector<8x32xf32>
    %269 = math.tanh %268 : vector<8x32xf32>
    %270 = arith.mulf %265, %269 : vector<8x32xf32>
    %271 = arith.truncf %270 : vector<8x32xf32> to vector<8x32xbf16>
    %c40 = arith.constant 40 : index
    %c0_70 = arith.constant 0 : index
    %272 = vector.load %arg15[%c40, %c0_70] : memref<64x32xf32, #tpu.memory_space<vmem>>, vector<8x32xf32>
    tpu.vector_store %arg15[%c40, %c0_70], %270 {strides = array<i32>} : memref<64x32xf32, #tpu.memory_space<vmem>>, vector<8x32xf32>,
    %273 = vector.extract_strided_slice %18 {offsets = [56, 0], sizes = [8, 128], strides = [1, 1]} : vector<64x128xf32> to vector<8x128xf32>
    %cst_71 = arith.constant dense<0.000000e+00> : vector<8x128xf32>
    %274 = tpu.matmul %251, %11, %cst_71 {dimension_numbers = #tpu.dot_dimension_numbers<[1], [0], [0], [1], [0, 0, 1, 1], [], []>} : vector<8x32xbf16>, vector<32x128xbf16>, vector<8x128xf32> -> vector<8x128xf32>
    %275 = arith.addf %273, %274 : vector<8x128xf32>
    %276 = math.tanh %275 : vector<8x128xf32>
    %cst_72 = arith.constant 5.000000e-01 : f32
    %277 = vector.broadcast %cst_72 : f32 to vector<8x128xf32>
    %278 = arith.mulf %276, %277 : vector<8x128xf32>
    %cst_73 = arith.constant 5.000000e-01 : f32
    %279 = vector.broadcast %cst_73 : f32 to vector<8x128xf32>
    %280 = arith.addf %278, %279 : vector<8x128xf32>
    %281 = vector.extract_strided_slice %280 {offsets = [0, 0], sizes = [8, 32], strides = [1, 1]} : vector<8x128xf32> to vector<8x32xf32>
    %282 = vector.extract_strided_slice %280 {offsets = [0, 32], sizes = [8, 32], strides = [1, 1]} : vector<8x128xf32> to vector<8x32xf32>
    %283 = vector.extract_strided_slice %276 {offsets = [0, 64], sizes = [8, 32], strides = [1, 1]} : vector<8x128xf32> to vector<8x32xf32>
    %284 = vector.extract_strided_slice %280 {offsets = [0, 96], sizes = [8, 32], strides = [1, 1]} : vector<8x128xf32> to vector<8x32xf32>
    %285 = arith.mulf %282, %248 : vector<8x32xf32>
    %286 = arith.mulf %281, %283 : vector<8x32xf32>
    %287 = arith.addf %285, %286 : vector<8x32xf32>
    %288 = math.tanh %287 : vector<8x32xf32>
    %289 = arith.mulf %284, %288 : vector<8x32xf32>
    %290 = arith.truncf %289 : vector<8x32xf32> to vector<8x32xbf16>
    %cst_74 = arith.constant dense<0.000000e+00> : vector<8x128xf32>
    %291 = tpu.matmul %251, %10, %cst_74 {dimension_numbers = #tpu.dot_dimension_numbers<[1], [0], [0], [1], [0, 0, 1, 1], [], []>} : vector<8x32xbf16>, vector<32x128xbf16>, vector<8x128xf32> -> vector<8x128xf32>
    %cst_75 = arith.constant dense<0.000000e+00> : vector<8x128xf32>
    %292 = tpu.matmul %271, %12, %cst_75 {dimension_numbers = #tpu.dot_dimension_numbers<[1], [0], [0], [1], [0, 0, 1, 1], [], []>} : vector<8x32xbf16>, vector<32x128xbf16>, vector<8x128xf32> -> vector<8x128xf32>
    %293 = arith.addf %291, %292 : vector<8x128xf32>
    %294 = vector.broadcast %14 : vector<1x128xf32> to vector<8x128xf32>
    %295 = arith.addf %293, %294 : vector<8x128xf32>
    %296 = math.tanh %295 : vector<8x128xf32>
    %cst_76 = arith.constant 5.000000e-01 : f32
    %297 = vector.broadcast %cst_76 : f32 to vector<8x128xf32>
    %298 = arith.mulf %296, %297 : vector<8x128xf32>
    %cst_77 = arith.constant 5.000000e-01 : f32
    %299 = vector.broadcast %cst_77 : f32 to vector<8x128xf32>
    %300 = arith.addf %298, %299 : vector<8x128xf32>
    %301 = vector.extract_strided_slice %300 {offsets = [0, 0], sizes = [8, 32], strides = [1, 1]} : vector<8x128xf32> to vector<8x32xf32>
    %302 = vector.extract_strided_slice %300 {offsets = [0, 32], sizes = [8, 32], strides = [1, 1]} : vector<8x128xf32> to vector<8x32xf32>
    %303 = vector.extract_strided_slice %296 {offsets = [0, 64], sizes = [8, 32], strides = [1, 1]} : vector<8x128xf32> to vector<8x32xf32>
    %304 = vector.extract_strided_slice %300 {offsets = [0, 96], sizes = [8, 32], strides = [1, 1]} : vector<8x128xf32> to vector<8x32xf32>
    %305 = arith.mulf %302, %268 : vector<8x32xf32>
    %306 = arith.mulf %301, %303 : vector<8x32xf32>
    %307 = arith.addf %305, %306 : vector<8x32xf32>
    %308 = math.tanh %307 : vector<8x32xf32>
    %309 = arith.mulf %304, %308 : vector<8x32xf32>
    %310 = arith.truncf %309 : vector<8x32xf32> to vector<8x32xbf16>
    %c48 = arith.constant 48 : index
    %c0_78 = arith.constant 0 : index
    %311 = vector.load %arg15[%c48, %c0_78] : memref<64x32xf32, #tpu.memory_space<vmem>>, vector<8x32xf32>
    tpu.vector_store %arg15[%c48, %c0_78], %309 {strides = array<i32>} : memref<64x32xf32, #tpu.memory_space<vmem>>, vector<8x32xf32>,
    %cst_79 = arith.constant dense<0.000000e+00> : vector<8x128xf32>
    %312 = tpu.matmul %290, %10, %cst_79 {dimension_numbers = #tpu.dot_dimension_numbers<[1], [0], [0], [1], [0, 0, 1, 1], [], []>} : vector<8x32xbf16>, vector<32x128xbf16>, vector<8x128xf32> -> vector<8x128xf32>
    %cst_80 = arith.constant dense<0.000000e+00> : vector<8x128xf32>
    %313 = tpu.matmul %310, %12, %cst_80 {dimension_numbers = #tpu.dot_dimension_numbers<[1], [0], [0], [1], [0, 0, 1, 1], [], []>} : vector<8x32xbf16>, vector<32x128xbf16>, vector<8x128xf32> -> vector<8x128xf32>
    %314 = arith.addf %312, %313 : vector<8x128xf32>
    %315 = vector.broadcast %14 : vector<1x128xf32> to vector<8x128xf32>
    %316 = arith.addf %314, %315 : vector<8x128xf32>
    %317 = math.tanh %316 : vector<8x128xf32>
    %cst_81 = arith.constant 5.000000e-01 : f32
    %318 = vector.broadcast %cst_81 : f32 to vector<8x128xf32>
    %319 = arith.mulf %317, %318 : vector<8x128xf32>
    %cst_82 = arith.constant 5.000000e-01 : f32
    %320 = vector.broadcast %cst_82 : f32 to vector<8x128xf32>
    %321 = arith.addf %319, %320 : vector<8x128xf32>
    %322 = vector.extract_strided_slice %321 {offsets = [0, 0], sizes = [8, 32], strides = [1, 1]} : vector<8x128xf32> to vector<8x32xf32>
    %323 = vector.extract_strided_slice %321 {offsets = [0, 32], sizes = [8, 32], strides = [1, 1]} : vector<8x128xf32> to vector<8x32xf32>
    %324 = vector.extract_strided_slice %317 {offsets = [0, 64], sizes = [8, 32], strides = [1, 1]} : vector<8x128xf32> to vector<8x32xf32>
    %325 = vector.extract_strided_slice %321 {offsets = [0, 96], sizes = [8, 32], strides = [1, 1]} : vector<8x128xf32> to vector<8x32xf32>
    %326 = arith.mulf %323, %307 : vector<8x32xf32>
    %327 = arith.mulf %322, %324 : vector<8x32xf32>
    %328 = arith.addf %326, %327 : vector<8x32xf32>
    %329 = math.tanh %328 : vector<8x32xf32>
    %330 = arith.mulf %325, %329 : vector<8x32xf32>
    %c56 = arith.constant 56 : index
    %c0_83 = arith.constant 0 : index
    %331 = vector.load %arg15[%c56, %c0_83] : memref<64x32xf32, #tpu.memory_space<vmem>>, vector<8x32xf32>
    tpu.vector_store %arg15[%c56, %c0_83], %330 {strides = array<i32>} : memref<64x32xf32, #tpu.memory_space<vmem>>, vector<8x32xf32>,
    %c0_84 = arith.constant 0 : index
    %c0_85 = arith.constant 0 : index
    %332 = vector.load %arg13[%c0_84, %c0_85] : memref<16x32xf32, #tpu.memory_space<vmem>>, vector<8x32xf32>
    tpu.vector_store %arg13[%c0_84, %c0_85], %289 {strides = array<i32>} : memref<16x32xf32, #tpu.memory_space<vmem>>, vector<8x32xf32>,
    %c0_86 = arith.constant 0 : index
    %c0_87 = arith.constant 0 : index
    %333 = vector.load %arg14[%c0_86, %c0_87] : memref<16x32xf32, #tpu.memory_space<vmem>>, vector<8x32xf32>
    tpu.vector_store %arg14[%c0_86, %c0_87], %287 {strides = array<i32>} : memref<16x32xf32, #tpu.memory_space<vmem>>, vector<8x32xf32>,
    %c8_88 = arith.constant 8 : index
    %c0_89 = arith.constant 0 : index
    %334 = vector.load %arg13[%c8_88, %c0_89] : memref<16x32xf32, #tpu.memory_space<vmem>>, vector<8x32xf32>
    tpu.vector_store %arg13[%c8_88, %c0_89], %330 {strides = array<i32>} : memref<16x32xf32, #tpu.memory_space<vmem>>, vector<8x32xf32>,
    %c8_90 = arith.constant 8 : index
    %c0_91 = arith.constant 0 : index
    %335 = vector.load %arg14[%c8_90, %c0_91] : memref<16x32xf32, #tpu.memory_space<vmem>>, vector<8x32xf32>
    tpu.vector_store %arg14[%c8_90, %c0_91], %328 {strides = array<i32>} : memref<16x32xf32, #tpu.memory_space<vmem>>, vector<8x32xf32>,
    %c0_92 = arith.constant 0 : index
    %c0_93 = arith.constant 0 : index
    %336 = vector.load %arg15[%c0_92, %c0_93] : memref<64x32xf32, #tpu.memory_space<vmem>>, vector<64x32xf32>
    %c0_94 = arith.constant 0 : index
    %c0_95 = arith.constant 0 : index
    %337 = vector.load %arg10[%c0_94, %c0_95] : memref<1x32xf32, #tpu.memory_space<vmem>>, vector<1x32xf32>
    %338 = vector.broadcast %337 : vector<1x32xf32> to vector<64x32xf32>
    %339 = arith.mulf %336, %338 : vector<64x32xf32>
    %cst_96 = arith.constant dense<0.000000e+00> : vector<64xf32>
    %340 = vector.multi_reduction <add>, %339, %cst_96 [1] : vector<64x32xf32> to vector<64xf32>
    %341 = vector.shape_cast %340 : vector<64xf32> to vector<64x1xf32>
    %c0_97 = arith.constant 0 : index
    %c0_98 = arith.constant 0 : index
    %342 = vector.load %arg11[%c0_97, %c0_98] : memref<1x1xf32, #tpu.memory_space<vmem>>, vector<1x1xf32>
    %343 = vector.broadcast %342 : vector<1x1xf32> to vector<64x1xf32>
    %344 = arith.addf %341, %343 : vector<64x1xf32>
    %345 = math.tanh %344 : vector<64x1xf32>
    %c0_99 = arith.constant 0 : index
    %c0_100 = arith.constant 0 : index
    %346 = vector.load %arg12[%c0_99, %c0_100] : memref<64x1xf32, #tpu.memory_space<vmem>>, vector<64x1xf32>
    tpu.vector_store %arg12[%c0_99, %c0_100], %345 {strides = array<i32>} : memref<64x1xf32, #tpu.memory_space<vmem>>, vector<64x1xf32>,
    return
  }
  func.func @transform_0(%arg0: i32) -> (i32, i32) {
    %c0_i32 = arith.constant 0 : i32
    %c0_i32_0 = arith.constant 0 : i32
    %c0_i32_1 = arith.constant 0 : i32
    return %c0_i32, %c0_i32_0 : i32, i32
  }
  func.func @transform_1(%arg0: i32) -> (i32, i32) {
    %c0_i32 = arith.constant 0 : i32
    %c0_i32_0 = arith.constant 0 : i32
    %c0_i32_1 = arith.constant 0 : i32
    return %c0_i32, %c0_i32_0 : i32, i32
  }
  func.func @transform_2(%arg0: i32) -> (i32, i32) {
    %c0_i32 = arith.constant 0 : i32
    %c0_i32_0 = arith.constant 0 : i32
    %c0_i32_1 = arith.constant 0 : i32
    return %c0_i32, %c0_i32_0 : i32, i32
  }
  func.func @transform_3(%arg0: i32) -> (i32, i32) {
    %c0_i32 = arith.constant 0 : i32
    %c0_i32_0 = arith.constant 0 : i32
    %c0_i32_1 = arith.constant 0 : i32
    return %c0_i32, %c0_i32_0 : i32, i32
  }
  func.func @transform_4(%arg0: i32) -> (i32, i32) {
    %c0_i32 = arith.constant 0 : i32
    %c0_i32_0 = arith.constant 0 : i32
    %c0_i32_1 = arith.constant 0 : i32
    return %c0_i32, %c0_i32_0 : i32, i32
  }
  func.func @transform_5(%arg0: i32) -> (i32, i32) {
    %c0_i32 = arith.constant 0 : i32
    %c0_i32_0 = arith.constant 0 : i32
    %c0_i32_1 = arith.constant 0 : i32
    return %c0_i32, %c0_i32_0 : i32, i32
  }
  func.func @transform_6(%arg0: i32) -> (i32, i32) {
    %c0_i32 = arith.constant 0 : i32
    %c0_i32_0 = arith.constant 0 : i32
    %c0_i32_1 = arith.constant 0 : i32
    return %c0_i32, %c0_i32_0 : i32, i32
  }
  func.func @transform_7(%arg0: i32) -> (i32, i32) {
    %c0_i32 = arith.constant 0 : i32
    %c0_i32_0 = arith.constant 0 : i32
    %c0_i32_1 = arith.constant 0 : i32
    return %c0_i32, %c0_i32_0 : i32, i32
  }
  func.func @transform_8(%arg0: i32) -> (i32, i32) {
    %c0_i32 = arith.constant 0 : i32
    %c0_i32_0 = arith.constant 0 : i32
    %c0_i32_1 = arith.constant 0 : i32
    return %c0_i32, %c0_i32_0 : i32, i32
  }
  func.func @transform_9(%arg0: i32) -> (i32, i32) {
    %c0_i32 = arith.constant 0 : i32
    %c0_i32_0 = arith.constant 0 : i32
    %c0_i32_1 = arith.constant 0 : i32
    return %c0_i32, %c0_i32_0 : i32, i32
  }
  func.func @transform_10(%arg0: i32) -> (i32, i32) {
    %c0_i32 = arith.constant 0 : i32
    %c0_i32_0 = arith.constant 0 : i32
    %c0_i32_1 = arith.constant 0 : i32
    return %c0_i32, %c0_i32_0 : i32, i32
  }
  func.func @transform_11(%arg0: i32) -> (i32, i32) {
    %c0_i32 = arith.constant 0 : i32
    %c0_i32_0 = arith.constant 0 : i32
    %c0_i32_1 = arith.constant 0 : i32
    return %c0_i32, %c0_i32_0 : i32, i32
  }
  func.func @transform_12(%arg0: i32) -> (i32, i32) {
    %c0_i32 = arith.constant 0 : i32
    %c0_i32_0 = arith.constant 0 : i32
    %c0_i32_1 = arith.constant 0 : i32
    return %c0_i32, %c0_i32_0 : i32, i32
  }
  func.func @transform_13(%arg0: i32) -> (i32, i32) {
    %c0_i32 = arith.constant 0 : i32
    %c0_i32_0 = arith.constant 0 : i32
    %c0_i32_1 = arith.constant 0 : i32
    return %c0_i32, %c0_i32_0 : i32, i32
  }
}

</mosaic_0001>

<llo_original>
// kernel: lstm_model_forward.1
$region0: #{lstm_model_forward.1}
  #allocation0 [shape = 'u32[]', space=smem, size = 0x4, offset = 0x4, fixed_abs, tag = 'smem constant byte address 0x4 - core index']
  #allocation1 [shape = 'u32[144,128]{1,0:T(1,128)}', space=vmem, size = 0x12000, scoped, tag = 'internal scratch']
  #allocation2 [shape = 'f32[64,32]{1,0:T(8,128)}', space=vmem, size = 0x8000, scoped, tag = 'scratch operand']
  #allocation3 [shape = 'f32[1,1]{1,0:T(1,128)S(1)}', space=vmem, size = 0x200, scoped, tag = 'scoped memory for lstm_model_forward.1']
  %s0 = inlined_call_operand.vmem [shape: f32[64,1], index: 0, kind: input, shape index: {}]
  %s1 = inlined_call_operand.vmem [shape: f32[1,16], index: 1, kind: input, shape index: {}]
  %s2 = inlined_call_operand.vmem [shape: f32[1,16], index: 2, kind: input, shape index: {}]
  %s3 = inlined_call_operand.vmem [shape: bf16[16,128], index: 3, kind: input, shape index: {}]
  %s4 = inlined_call_operand.vmem [shape: bf16[32,128], index: 4, kind: input, shape index: {}]
  %s5 = inlined_call_operand.vmem [shape: f32[1,128], index: 5, kind: input, shape index: {}]
  %s6 = inlined_call_operand.vmem [shape: bf16[32,128], index: 6, kind: input, shape index: {}]
  %s7 = inlined_call_operand.vmem [shape: bf16[32,128], index: 7, kind: input, shape index: {}]
  %s8 = inlined_call_operand.vmem [shape: f32[1,128], index: 8, kind: input, shape index: {}]
  %s9 = inlined_call_operand.vmem [shape: f32[1,32], index: 9, kind: input, shape index: {}]
  %s10 = inlined_call_operand.<no memory space> [shape: f32[1,1], index: 10, kind: input, shape index: {}]
  %s11 = inlined_call_operand.vmem [shape: f32[64,1], index: 11, kind: output, shape index: {0}]
  %s12 = inlined_call_operand.vmem [shape: f32[16,32], index: 12, kind: output, shape index: {1}]
  %s13 = inlined_call_operand.vmem [shape: f32[16,32], index: 13, kind: output, shape index: {2}]
  %14 = xla_tuple %s11, %s12, %s13
  %s15 = sld [smem:[#allocation0]]
  $region70: #{lstm_model_forward.1} parent=0
    _
  %s17 = ssub.s32 1, %s15
  %s18 = scalar_select 0, %s17, %s15
  %v19 = vstv %s10
  %20 = vst [vmem:[#allocation3] sm:$0x1] %v19
  // Predicated region
  $region2: #{lstm_model_forward.1} parent=0 // pred_check
    _
  $region3: #{lstm_model_forward.1} parent=0 // pred_check_branch
    %22 = sbr.rel (0) target = $region5
  $region4: #{lstm_model_forward.1} parent=0 // pred_region
    _
  $region5: #{lstm_model_forward.1} parent=0 // pred_fallthru
    _
  // Predicated region
  $region6: #{lstm_model_forward.1} parent=0 // pred_check
    _
  $region7: #{lstm_model_forward.1} parent=0 // pred_check_branch
    %24 = sbr.rel (0) target = $region9
  $region8: #{lstm_model_forward.1} parent=0 // pred_region
    _
  $region9: #{lstm_model_forward.1} parent=0 // pred_fallthru
    _
  // Predicated region
  $region10: #{lstm_model_forward.1} parent=0 // pred_check
    _
  $region11: #{lstm_model_forward.1} parent=0 // pred_check_branch
    %26 = sbr.rel (0) target = $region13
  $region12: #{lstm_model_forward.1} parent=0 // pred_region
    _
  $region13: #{lstm_model_forward.1} parent=0 // pred_fallthru
    _
  // Predicated region
  $region14: #{lstm_model_forward.1} parent=0 // pred_check
    _
  $region15: #{lstm_model_forward.1} parent=0 // pred_check_branch
    %28 = sbr.rel (0) target = $region17
  $region16: #{lstm_model_forward.1} parent=0 // pred_region
    _
  $region17: #{lstm_model_forward.1} parent=0 // pred_fallthru
    _
  // Predicated region
  $region18: #{lstm_model_forward.1} parent=0 // pred_check
    _
  $region19: #{lstm_model_forward.1} parent=0 // pred_check_branch
    %30 = sbr.rel (0) target = $region21
  $region20: #{lstm_model_forward.1} parent=0 // pred_region
    _
  $region21: #{lstm_model_forward.1} parent=0 // pred_fallthru
    _
  // Predicated region
  $region22: #{lstm_model_forward.1} parent=0 // pred_check
    _
  $region23: #{lstm_model_forward.1} parent=0 // pred_check_branch
    %32 = sbr.rel (0) target = $region25
  $region24: #{lstm_model_forward.1} parent=0 // pred_region
    _
  $region25: #{lstm_model_forward.1} parent=0 // pred_fallthru
    _
  // Predicated region
  $region26: #{lstm_model_forward.1} parent=0 // pred_check
    _
  $region27: #{lstm_model_forward.1} parent=0 // pred_check_branch
    %34 = sbr.rel (0) target = $region29
  $region28: #{lstm_model_forward.1} parent=0 // pred_region
    _
  $region29: #{lstm_model_forward.1} parent=0 // pred_fallthru
    _
  // Predicated region
  $region30: #{lstm_model_forward.1} parent=0 // pred_check
    _
  $region31: #{lstm_model_forward.1} parent=0 // pred_check_branch
    %36 = sbr.rel (0) target = $region33
  $region32: #{lstm_model_forward.1} parent=0 // pred_region
    _
  $region33: #{lstm_model_forward.1} parent=0 // pred_fallthru
    _
  // Predicated region
  $region34: #{lstm_model_forward.1} parent=0 // pred_check
    _
  $region35: #{lstm_model_forward.1} parent=0 // pred_check_branch
    %38 = sbr.rel (0) target = $region37
  $region36: #{lstm_model_forward.1} parent=0 // pred_region
    _
  $region37: #{lstm_model_forward.1} parent=0 // pred_fallthru
    _
  // Predicated region
  $region38: #{lstm_model_forward.1} parent=0 // pred_check
    _
  $region39: #{lstm_model_forward.1} parent=0 // pred_check_branch
    %40 = sbr.rel (0) target = $region41
  $region40: #{lstm_model_forward.1} parent=0 // pred_region
    _
  $region41: #{lstm_model_forward.1} parent=0 // pred_fallthru
    _
  // Predicated region
  $region42: #{lstm_model_forward.1} parent=0 // pred_check
    _
  $region43: #{lstm_model_forward.1} parent=0 // pred_check_branch
    %42 = sbr.rel (0) target = $region45
  $region44: #{lstm_model_forward.1} parent=0 // pred_region
    _
  $region45: #{lstm_model_forward.1} parent=0 // pred_fallthru
    _
  %v44 = vld [vmem:[%s0] sm:$0xff]
  %v45 = vld [vmem:[%s0 + $0x8] sm:$0xff]
  %v46 = vld [vmem:[%s0 + $0x10] sm:$0xff]
  %v47 = vld [vmem:[%s0 + $0x18] sm:$0xff]
  %v48 = vld [vmem:[%s0 + $0x20] sm:$0xff]
  %v49 = vld [vmem:[%s0 + $0x28] sm:$0xff]
  %v50 = vld [vmem:[%s0 + $0x30] sm:$0xff]
  %v51 = vld [vmem:[%s0 + $0x38] sm:$0xff]
  %v52 = vld [vmem:[%s1] sm:$0x1]
  %54 = vset.pattern.permute.xlu0 0
  %55 = vperm.xlu0 %54, %v44
  %v56 = vpop.permute.xlu0 %55
  %59 = vset.pattern.permute.xlu0 0
  %60 = vperm.xlu0 %59, %v45
  %v61 = vpop.permute.xlu0 %60
  %64 = vset.pattern.permute.xlu0 0
  %65 = vperm.xlu0 %64, %v46
  %v66 = vpop.permute.xlu0 %65
  %69 = vset.pattern.permute.xlu0 0
  %70 = vperm.xlu0 %69, %v47
  %v71 = vpop.permute.xlu0 %70
  %74 = vset.pattern.permute.xlu0 0
  %75 = vperm.xlu0 %74, %v48
  %v76 = vpop.permute.xlu0 %75
  %79 = vset.pattern.permute.xlu0 0
  %80 = vperm.xlu0 %79, %v49
  %v81 = vpop.permute.xlu0 %80
  %84 = vset.pattern.permute.xlu0 0
  %85 = vperm.xlu0 %84, %v50
  %v86 = vpop.permute.xlu0 %85
  %89 = vset.pattern.permute.xlu0 0
  %90 = vperm.xlu0 %89, %v51
  %v91 = vpop.permute.xlu0 %90
  %v94 = vlaneseq
  %v95 = vshrl.u32 %v94, 7
  %v96 = vsub.s32 0, %v95
  %v97 = vrot.slane %v52, %v96
  %v99 = vmul.f32 %v56, %v97
  %v100 = vmul.f32 %v61, %v97
  %v101 = vmul.f32 %v66, %v97
  %v102 = vmul.f32 %v71, %v97
  %v103 = vmul.f32 %v76, %v97
  %v104 = vmul.f32 %v81, %v97
  %v105 = vmul.f32 %v86, %v97
  %v106 = vmul.f32 %v91, %v97
  %v107 = vld [vmem:[%s2] sm:$0x1]
  %v109 = vlaneseq
  %v110 = vshrl.u32 %v109, 7
  %v111 = vsub.s32 0, %v110
  %v112 = vrot.slane %v107, %v111
  %v114 = vadd.f32 %v99, %v112
  %v115 = vadd.f32 %v100, %v112
  %v116 = vadd.f32 %v101, %v112
  %v117 = vadd.f32 %v102, %v112
  %v118 = vadd.f32 %v103, %v112
  %v119 = vadd.f32 %v104, %v112
  %v120 = vadd.f32 %v105, %v112
  %v121 = vadd.f32 %v106, %v112
  %v122 = vtanh.pop %v114
  %v123 = vtanh.pop %v115
  %v124 = vtanh.pop %v116
  %v125 = vtanh.pop %v117
  %v126 = vtanh.pop %v118
  %v127 = vtanh.pop %v119
  %v128 = vtanh.pop %v120
  %v129 = vtanh.pop %v121
  %v130 = vld [vmem:[%s3] sm:$0xf]
  %v131 = vld [vmem:[%s3 + $0x4] sm:$0xf]
  %v132 = vld [vmem:[%s6] sm:$0xf]
  %v133 = vld [vmem:[%s6 + $0x4] sm:$0xf]
  %v134 = vld [vmem:[%s6 + $0x8] sm:$0xf]
  %v135 = vld [vmem:[%s6 + $0xc] sm:$0xf]
  %v136 = vld [vmem:[%s4] sm:$0xf]
  %v137 = vld [vmem:[%s4 + $0x4] sm:$0xf]
  %v138 = vld [vmem:[%s4 + $0x8] sm:$0xf]
  %v139 = vld [vmem:[%s4 + $0xc] sm:$0xf]
  %v140 = vld [vmem:[%s7] sm:$0xf]
  %v141 = vld [vmem:[%s7 + $0x4] sm:$0xf]
  %v142 = vld [vmem:[%s7 + $0x8] sm:$0xf]
  %v143 = vld [vmem:[%s7 + $0xc] sm:$0xf]
  %v144 = vld [vmem:[%s5] sm:$0x1]
  %v145 = vld [vmem:[%s8] sm:$0x1]
  %v146 = vpack.c.bf16 %v123, %v122
  %v147 = vpack.c.bf16 %v125, %v124
  %v148 = vpack.c.bf16 %v127, %v126
  %v149 = vpack.c.bf16 %v129, %v128
  %v151 = vlaneseq
  %v152 = vshrl.u32 %v151, 7
  %v153 = vsub.s32 0, %v152
  %v154 = vrot.slane %v144, %v153
  %v158 = vunpack.c.l.b16 %v130
  %v159 = vunpack.c.l.b16 %v131
  %v160 = vpack.c.b16 %v159, %v158
  %vm162 = vcmask 130048
  %v164 = vsel %vm162, %v146, 0
  %v167 = vsel %vm162, %v147, 0
  %v170 = vsel %vm162, %v148, 0
  %v173 = vsel %vm162, %v149, 0
  %175 = vmatprep.subr.bf16.mxu0 0
  %176 = vmatpush1.bf16.msra.mxu0 0
  %177 = vmatprep.subr.bf16.mxu0 0
  %178 = vmatpush1.bf16.msra.mxu0 0
  %179 = vmatprep.subr.bf16.mxu0 0
  %180 = vmatpush1.bf16.msra.mxu0 0
  %181 = vmatprep.subr.bf16.mxu0 0
  %182 = vmatpush1.bf16.msra.mxu0 0
  %183 = vmatprep.subr.bf16.mxu0 0
  %184 = vmatpush1.bf16.msra.mxu0 0
  %185 = vmatprep.subr.bf16.mxu0 0
  %186 = vmatpush1.bf16.msra.mxu0 0
  %187 = vmatprep.subr.bf16.mxu0 0
  %188 = vmatpush1.bf16.msra.mxu0 0
  %189 = vmatprep.subr.bf16.mxu0 0
  %190 = vmatpush1.bf16.msra.mxu0 %v160
  %191 = vmatprep.subr.bf16.mxu0 0
  %192 = vmatpush2.bf16.msra.mxu0 0
  %193 = vmatprep.subr.bf16.mxu0 0
  %194 = vmatpush2.bf16.msra.mxu0 0
  %195 = vmatprep.subr.bf16.mxu0 0
  %196 = vmatpush2.bf16.msra.mxu0 0
  %197 = vmatprep.subr.bf16.mxu0 0
  %198 = vmatpush2.bf16.msra.mxu0 0
  %199 = vmatprep.subr.bf16.mxu0 0
  %200 = vmatpush2.bf16.msra.mxu0 0
  %201 = vmatprep.subr.bf16.mxu0 0
  %202 = vmatpush2.bf16.msra.mxu0 0
  %203 = vmatprep.subr.bf16.mxu0 0
  %204 = vmatpush2.bf16.msra.mxu0 0
  %205 = vmatprep.subr.bf16.mxu0 0
  %206 = vmatpush2.bf16.msra.mxu0 0
  %207 = vmatprep.mubr.bf16.mxu0 0
  %208 = vmatmul.mubr.bf16.gmra.mxu0 %v164
  %v209 = vpop.f32.mrf.mxu0
  %v210 = vadd.f32 %v154, %v209
  %v211 = vpop.f32.mrf.mxu0
  %v212 = vpop.f32.mrf.mxu0
  %v213 = vadd.f32 %v154, %v212
  %v214 = vpop.f32.mrf.mxu0
  %215 = vmatprep.mubr.bf16.mxu0 0
  %216 = vmatmul.mubr.bf16.gmra.mxu0 %v167
  %v217 = vpop.f32.mrf.mxu0
  %v218 = vadd.f32 %v154, %v217
  %v219 = vpop.f32.mrf.mxu0
  %v220 = vpop.f32.mrf.mxu0
  %v221 = vadd.f32 %v154, %v220
  %v222 = vpop.f32.mrf.mxu0
  %223 = vmatprep.mubr.bf16.mxu0 0
  %224 = vmatmul.mubr.bf16.gmra.mxu0 %v170
  %v225 = vpop.f32.mrf.mxu0
  %v226 = vadd.f32 %v154, %v225
  %v227 = vpop.f32.mrf.mxu0
  %v228 = vpop.f32.mrf.mxu0
  %v229 = vadd.f32 %v154, %v228
  %v230 = vpop.f32.mrf.mxu0
  %231 = vmatprep.mubr.bf16.mxu0 0
  %232 = vmatmul.mubr.bf16.gmra.mxu0 %v173
  %v233 = vpop.f32.mrf.mxu0
  %v234 = vadd.f32 %v154, %v233
  %v235 = vpop.f32.mrf.mxu0
  %v236 = vpop.f32.mrf.mxu0
  %v237 = vadd.f32 %v154, %v236
  %v238 = vpop.f32.mrf.mxu0
  %239 = vdwg.mxu0
  %v244 = vunpack.c.l.b16 %v136
  %v245 = vunpack.c.l.b16 %v137
  %v246 = vunpack.c.l.b16 %v138
  %v247 = vunpack.c.l.b16 %v139
  %v248 = vpack.c.b16 %v245, %v244
  %v249 = vpack.c.b16 %v247, %v246
  %vm252 = vcmask 261120
  %v254 = vsel %vm252, 0, 0
  %256 = vmatprep.subr.bf16.mxu0 0
  %257 = vmatpush1.bf16.msra.mxu0 0
  %258 = vmatprep.subr.bf16.mxu0 0
  %259 = vmatpush1.bf16.msra.mxu0 0
  %260 = vmatprep.subr.bf16.mxu0 0
  %261 = vmatpush1.bf16.msra.mxu0 0
  %262 = vmatprep.subr.bf16.mxu0 0
  %263 = vmatpush1.bf16.msra.mxu0 0
  %264 = vmatprep.subr.bf16.mxu0 0
  %265 = vmatpush1.bf16.msra.mxu0 0
  %266 = vmatprep.subr.bf16.mxu0 0
  %267 = vmatpush1.bf16.msra.mxu0 0
  %268 = vmatprep.subr.bf16.mxu0 0
  %269 = vmatpush1.bf16.msra.mxu0 %v249
  %270 = vmatprep.subr.bf16.mxu0 0
  %271 = vmatpush1.bf16.msra.mxu0 %v248
  %272 = vmatprep.subr.bf16.mxu0 0
  %273 = vmatpush2.bf16.msra.mxu0 0
  %274 = vmatprep.subr.bf16.mxu0 0
  %275 = vmatpush2.bf16.msra.mxu0 0
  %276 = vmatprep.subr.bf16.mxu0 0
  %277 = vmatpush2.bf16.msra.mxu0 0
  %278 = vmatprep.subr.bf16.mxu0 0
  %279 = vmatpush2.bf16.msra.mxu0 0
  %280 = vmatprep.subr.bf16.mxu0 0
  %281 = vmatpush2.bf16.msra.mxu0 0
  %282 = vmatprep.subr.bf16.mxu0 0
  %283 = vmatpush2.bf16.msra.mxu0 0
  %284 = vmatprep.subr.bf16.mxu0 0
  %285 = vmatpush2.bf16.msra.mxu0 0
  %286 = vmatprep.subr.bf16.mxu0 0
  %287 = vmatpush2.bf16.msra.mxu0 0
  %288 = vmatprep.mubr.bf16.mxu0 0
  %289 = vmatmul.mubr.bf16.gmra.mxu0 %v254
  %v290 = vpop.f32.mrf.mxu0
  %v291 = vadd.f32 0.0, %v290
  %v292 = vpop.f32.mrf.mxu0
  %v293 = vpop.f32.mrf.mxu0
  %v294 = vpop.f32.mrf.mxu0
  %295 = vdwg.mxu0
  %v296 = vadd.f32 %v210, %v291
  %v297 = vtanh.pop %v296
  %v298 = vmul.f32 %v297, 0.5
  %v299 = vadd.f32 %v298, 0.5
  %v300 = vmul.f32 %v299, 0.0
  %302 = vrot.lane.b32.xlu0 %v297, 64
  %v303 = vpop.permute.xlu0 %302
  %v305 = vmul.f32 %v299, %v303
  %307 = vrot.lane.b32.xlu0 %v305, 32
  %v308 = vpop.permute.xlu0 %307
  %v310 = vadd.f32 %v300, %v308
  %v311 = vtanh.pop %v310
  %313 = vrot.lane.b32.xlu0 %v311, 64
  %v314 = vpop.permute.xlu0 %313
  %v316 = vmul.f32 %v299, %v314
  %v317 = vpack.c.bf16 %v316, %v316
  %319 = vrot.lane.b32.xlu0 %v317, 32
  %v320 = vpop.permute.xlu0 %319
  %v322 = vsel %vm252, %v320, 0
  %324 = vmatprep.subr.bf16.mxu0 0
  %325 = vmatpush1.bf16.msra.mxu0 0
  %326 = vmatprep.subr.bf16.mxu0 0
  %327 = vmatpush1.bf16.msra.mxu0 0
  %328 = vmatprep.subr.bf16.mxu0 0
  %329 = vmatpush1.bf16.msra.mxu0 0
  %330 = vmatprep.subr.bf16.mxu0 0
  %331 = vmatpush1.bf16.msra.mxu0 0
  %332 = vmatprep.subr.bf16.mxu0 0
  %333 = vmatpush1.bf16.msra.mxu0 0
  %334 = vmatprep.subr.bf16.mxu0 0
  %335 = vmatpush1.bf16.msra.mxu0 0
  %336 = vmatprep.subr.bf16.mxu0 0
  %337 = vmatpush1.bf16.msra.mxu0 %v249
  %338 = vmatprep.subr.bf16.mxu0 0
  %339 = vmatpush1.bf16.msra.mxu0 %v248
  %340 = vmatprep.subr.bf16.mxu0 0
  %341 = vmatpush2.bf16.msra.mxu0 0
  %342 = vmatprep.subr.bf16.mxu0 0
  %343 = vmatpush2.bf16.msra.mxu0 0
  %344 = vmatprep.subr.bf16.mxu0 0
  %345 = vmatpush2.bf16.msra.mxu0 0
  %346 = vmatprep.subr.bf16.mxu0 0
  %347 = vmatpush2.bf16.msra.mxu0 0
  %348 = vmatprep.subr.bf16.mxu0 0
  %349 = vmatpush2.bf16.msra.mxu0 0
  %350 = vmatprep.subr.bf16.mxu0 0
  %351 = vmatpush2.bf16.msra.mxu0 0
  %352 = vmatprep.subr.bf16.mxu0 0
  %353 = vmatpush2.bf16.msra.mxu0 0
  %354 = vmatprep.subr.bf16.mxu0 0
  %355 = vmatpush2.bf16.msra.mxu0 0
  %356 = vmatprep.mubr.bf16.mxu0 0
  %357 = vmatmul.mubr.bf16.gmra.mxu0 %v322
  %v358 = vpop.f32.mrf.mxu0
  %v359 = vadd.f32 0.0, %v358
  %v360 = vpop.f32.mrf.mxu0
  %v361 = vpop.f32.mrf.mxu0
  %v362 = vpop.f32.mrf.mxu0
  %363 = vdwg.mxu0
  %v364 = vadd.f32 %v213, %v359
  %v365 = vtanh.pop %v364
  %v366 = vmul.f32 %v365, 0.5
  %v367 = vadd.f32 %v366, 0.5
  %v368 = vmul.f32 %v367, %v310
  %370 = vrot.lane.b32.xlu0 %v365, 64
  %v371 = vpop.permute.xlu0 %370
  %v373 = vmul.f32 %v367, %v371
  %375 = vrot.lane.b32.xlu0 %v373, 32
  %v376 = vpop.permute.xlu0 %375
  %v378 = vadd.f32 %v368, %v376
  %v379 = vtanh.pop %v378
  %381 = vrot.lane.b32.xlu0 %v379, 64
  %v382 = vpop.permute.xlu0 %381
  %v384 = vmul.f32 %v367, %v382
  %v385 = vpack.c.bf16 %v384, %v384
  %v390 = vunpack.c.l.b16 %v140
  %v391 = vunpack.c.l.b16 %v141
  %v392 = vunpack.c.l.b16 %v142
  %v393 = vunpack.c.l.b16 %v143
  %v394 = vpack.c.b16 %v391, %v390
  %v395 = vpack.c.b16 %v393, %v392
  %398 = vmatprep.subr.bf16.mxu0 0
  %399 = vmatpush1.bf16.msra.mxu0 0
  %400 = vmatprep.subr.bf16.mxu0 0
  %401 = vmatpush1.bf16.msra.mxu0 0
  %402 = vmatprep.subr.bf16.mxu0 0
  %403 = vmatpush1.bf16.msra.mxu0 0
  %404 = vmatprep.subr.bf16.mxu0 0
  %405 = vmatpush1.bf16.msra.mxu0 0
  %406 = vmatprep.subr.bf16.mxu0 0
  %407 = vmatpush1.bf16.msra.mxu0 0
  %408 = vmatprep.subr.bf16.mxu0 0
  %409 = vmatpush1.bf16.msra.mxu0 0
  %410 = vmatprep.subr.bf16.mxu0 0
  %411 = vmatpush1.bf16.msra.mxu0 %v395
  %412 = vmatprep.subr.bf16.mxu0 0
  %413 = vmatpush1.bf16.msra.mxu0 %v394
  %414 = vmatprep.subr.bf16.mxu0 0
  %415 = vmatpush2.bf16.msra.mxu0 0
  %416 = vmatprep.subr.bf16.mxu0 0
  %417 = vmatpush2.bf16.msra.mxu0 0
  %418 = vmatprep.subr.bf16.mxu0 0
  %419 = vmatpush2.bf16.msra.mxu0 0
  %420 = vmatprep.subr.bf16.mxu0 0
  %421 = vmatpush2.bf16.msra.mxu0 0
  %422 = vmatprep.subr.bf16.mxu0 0
  %423 = vmatpush2.bf16.msra.mxu0 0
  %424 = vmatprep.subr.bf16.mxu0 0
  %425 = vmatpush2.bf16.msra.mxu0 0
  %426 = vmatprep.subr.bf16.mxu0 0
  %427 = vmatpush2.bf16.msra.mxu0 0
  %428 = vmatprep.subr.bf16.mxu0 0
  %429 = vmatpush2.bf16.msra.mxu0 0
  %430 = vmatprep.mubr.bf16.mxu0 0
  %431 = vmatmul.mubr.bf16.gmra.mxu0 %v254
  %v432 = vpop.f32.mrf.mxu0
  %v433 = vadd.f32 0.0, %v432
  %v434 = vpop.f32.mrf.mxu0
  %v435 = vpop.f32.mrf.mxu0
  %v436 = vpop.f32.mrf.mxu0
  %437 = vdwg.mxu0
  %v442 = vunpack.c.l.b16 %v132
  %v443 = vunpack.c.l.b16 %v133
  %v444 = vunpack.c.l.b16 %v134
  %v445 = vunpack.c.l.b16 %v135
  %v446 = vpack.c.b16 %v443, %v442
  %v447 = vpack.c.b16 %v445, %v444
  %450 = vmatprep.subr.bf16.mxu0 0
  %451 = vmatpush1.bf16.msra.mxu0 0
  %452 = vmatprep.subr.bf16.mxu0 0
  %453 = vmatpush1.bf16.msra.mxu0 0
  %454 = vmatprep.subr.bf16.mxu0 0
  %455 = vmatpush1.bf16.msra.mxu0 0
  %456 = vmatprep.subr.bf16.mxu0 0
  %457 = vmatpush1.bf16.msra.mxu0 0
  %458 = vmatprep.subr.bf16.mxu0 0
  %459 = vmatpush1.bf16.msra.mxu0 0
  %460 = vmatprep.subr.bf16.mxu0 0
  %461 = vmatpush1.bf16.msra.mxu0 0
  %462 = vmatprep.subr.bf16.mxu0 0
  %463 = vmatpush1.bf16.msra.mxu0 %v447
  %464 = vmatprep.subr.bf16.mxu0 0
  %465 = vmatpush1.bf16.msra.mxu0 %v446
  %466 = vmatprep.subr.bf16.mxu0 0
  %467 = vmatpush2.bf16.msra.mxu0 0
  %468 = vmatprep.subr.bf16.mxu0 0
  %469 = vmatpush2.bf16.msra.mxu0 0
  %470 = vmatprep.subr.bf16.mxu0 0
  %471 = vmatpush2.bf16.msra.mxu0 0
  %472 = vmatprep.subr.bf16.mxu0 0
  %473 = vmatpush2.bf16.msra.mxu0 0
  %474 = vmatprep.subr.bf16.mxu0 0
  %475 = vmatpush2.bf16.msra.mxu0 0
  %476 = vmatprep.subr.bf16.mxu0 0
  %477 = vmatpush2.bf16.msra.mxu0 0
  %478 = vmatprep.subr.bf16.mxu0 0
  %479 = vmatpush2.bf16.msra.mxu0 0
  %480 = vmatprep.subr.bf16.mxu0 0
  %481 = vmatpush2.bf16.msra.mxu0 0
  %482 = vmatprep.mubr.bf16.mxu0 0
  %483 = vmatmul.mubr.bf16.gmra.mxu0 %v322
  %v484 = vpop.f32.mrf.mxu0
  %v485 = vadd.f32 %v433, %v484
  %v486 = vpop.f32.mrf.mxu0
  %v487 = vpop.f32.mrf.mxu0
  %v488 = vpop.f32.mrf.mxu0
  %489 = vdwg.mxu0
  %v491 = vlaneseq
  %v492 = vshrl.u32 %v491, 7
  %v493 = vsub.s32 0, %v492
  %v494 = vrot.slane %v145, %v493
  %v496 = vadd.f32 %v485, %v494
  %v497 = vtanh.pop %v496
  %v498 = vmul.f32 %v497, 0.5
  %v499 = vadd.f32 %v498, 0.5
  %v500 = vmul.f32 %v499, 0.0
  %502 = vrot.lane.b32.xlu0 %v497, 64
  %v503 = vpop.permute.xlu0 %502
  %v505 = vmul.f32 %v499, %v503
  %507 = vrot.lane.b32.xlu0 %v505, 32
  %v508 = vpop.permute.xlu0 %507
  %v510 = vadd.f32 %v500, %v508
  %v511 = vtanh.pop %v510
  %513 = vrot.lane.b32.xlu0 %v511, 64
  %v514 = vpop.permute.xlu0 %513
  %v516 = vmul.f32 %v499, %v514
  %v517 = vpack.c.bf16 %v516, %v516
  %519 = vrot.lane.b32.xlu0 %v516, 32
  %v520 = vpop.permute.xlu0 %519
  %522 = vst.msk [vmem:[#allocation2] sm:$0xff] %vm252, %v520
  %524 = vrot.lane.b32.xlu0 %v385, 32
  %v525 = vpop.permute.xlu0 %524
  %v527 = vsel %vm252, %v525, 0
  %529 = vmatprep.subr.bf16.mxu0 0
  %530 = vmatpush1.bf16.msra.mxu0 0
  %531 = vmatprep.subr.bf16.mxu0 0
  %532 = vmatpush1.bf16.msra.mxu0 0
  %533 = vmatprep.subr.bf16.mxu0 0
  %534 = vmatpush1.bf16.msra.mxu0 0
  %535 = vmatprep.subr.bf16.mxu0 0
  %536 = vmatpush1.bf16.msra.mxu0 0
  %537 = vmatprep.subr.bf16.mxu0 0
  %538 = vmatpush1.bf16.msra.mxu0 0
  %539 = vmatprep.subr.bf16.mxu0 0
  %540 = vmatpush1.bf16.msra.mxu0 0
  %541 = vmatprep.subr.bf16.mxu0 0
  %542 = vmatpush1.bf16.msra.mxu0 %v249
  %543 = vmatprep.subr.bf16.mxu0 0
  %544 = vmatpush1.bf16.msra.mxu0 %v248
  %545 = vmatprep.subr.bf16.mxu0 0
  %546 = vmatpush2.bf16.msra.mxu0 0
  %547 = vmatprep.subr.bf16.mxu0 0
  %548 = vmatpush2.bf16.msra.mxu0 0
  %549 = vmatprep.subr.bf16.mxu0 0
  %550 = vmatpush2.bf16.msra.mxu0 0
  %551 = vmatprep.subr.bf16.mxu0 0
  %552 = vmatpush2.bf16.msra.mxu0 0
  %553 = vmatprep.subr.bf16.mxu0 0
  %554 = vmatpush2.bf16.msra.mxu0 0
  %555 = vmatprep.subr.bf16.mxu0 0
  %556 = vmatpush2.bf16.msra.mxu0 0
  %557 = vmatprep.subr.bf16.mxu0 0
  %558 = vmatpush2.bf16.msra.mxu0 0
  %559 = vmatprep.subr.bf16.mxu0 0
  %560 = vmatpush2.bf16.msra.mxu0 0
  %561 = vmatprep.mubr.bf16.mxu0 0
  %562 = vmatmul.mubr.bf16.gmra.mxu0 %v527
  %v563 = vpop.f32.mrf.mxu0
  %v564 = vadd.f32 0.0, %v563
  %v565 = vpop.f32.mrf.mxu0
  %v566 = vpop.f32.mrf.mxu0
  %v567 = vpop.f32.mrf.mxu0
  %568 = vdwg.mxu0
  %v569 = vadd.f32 %v218, %v564
  %v570 = vtanh.pop %v569
  %v571 = vmul.f32 %v570, 0.5
  %v572 = vadd.f32 %v571, 0.5
  %v573 = vmul.f32 %v572, %v378
  %575 = vrot.lane.b32.xlu0 %v570, 64
  %v576 = vpop.permute.xlu0 %575
  %v578 = vmul.f32 %v572, %v576
  %580 = vrot.lane.b32.xlu0 %v578, 32
  %v581 = vpop.permute.xlu0 %580
  %v583 = vadd.f32 %v573, %v581
  %v584 = vtanh.pop %v583
  %586 = vrot.lane.b32.xlu0 %v584, 64
  %v587 = vpop.permute.xlu0 %586
  %v589 = vmul.f32 %v572, %v587
  %v590 = vpack.c.bf16 %v589, %v589
  %592 = vrot.lane.b32.xlu0 %v517, 32
  %v593 = vpop.permute.xlu0 %592
  %v595 = vsel %vm252, %v593, 0
  %597 = vmatprep.subr.bf16.mxu0 0
  %598 = vmatpush1.bf16.msra.mxu0 0
  %599 = vmatprep.subr.bf16.mxu0 0
  %600 = vmatpush1.bf16.msra.mxu0 0
  %601 = vmatprep.subr.bf16.mxu0 0
  %602 = vmatpush1.bf16.msra.mxu0 0
  %603 = vmatprep.subr.bf16.mxu0 0
  %604 = vmatpush1.bf16.msra.mxu0 0
  %605 = vmatprep.subr.bf16.mxu0 0
  %606 = vmatpush1.bf16.msra.mxu0 0
  %607 = vmatprep.subr.bf16.mxu0 0
  %608 = vmatpush1.bf16.msra.mxu0 0
  %609 = vmatprep.subr.bf16.mxu0 0
  %610 = vmatpush1.bf16.msra.mxu0 %v395
  %611 = vmatprep.subr.bf16.mxu0 0
  %612 = vmatpush1.bf16.msra.mxu0 %v394
  %613 = vmatprep.subr.bf16.mxu0 0
  %614 = vmatpush2.bf16.msra.mxu0 0
  %615 = vmatprep.subr.bf16.mxu0 0
  %616 = vmatpush2.bf16.msra.mxu0 0
  %617 = vmatprep.subr.bf16.mxu0 0
  %618 = vmatpush2.bf16.msra.mxu0 0
  %619 = vmatprep.subr.bf16.mxu0 0
  %620 = vmatpush2.bf16.msra.mxu0 0
  %621 = vmatprep.subr.bf16.mxu0 0
  %622 = vmatpush2.bf16.msra.mxu0 0
  %623 = vmatprep.subr.bf16.mxu0 0
  %624 = vmatpush2.bf16.msra.mxu0 0
  %625 = vmatprep.subr.bf16.mxu0 0
  %626 = vmatpush2.bf16.msra.mxu0 0
  %627 = vmatprep.subr.bf16.mxu0 0
  %628 = vmatpush2.bf16.msra.mxu0 0
  %629 = vmatprep.mubr.bf16.mxu0 0
  %630 = vmatmul.mubr.bf16.gmra.mxu0 %v595
  %v631 = vpop.f32.mrf.mxu0
  %v632 = vadd.f32 0.0, %v631
  %v633 = vpop.f32.mrf.mxu0
  %v634 = vpop.f32.mrf.mxu0
  %v635 = vpop.f32.mrf.mxu0
  %636 = vdwg.mxu0
  %637 = vmatprep.subr.bf16.mxu0 0
  %638 = vmatpush1.bf16.msra.mxu0 0
  %639 = vmatprep.subr.bf16.mxu0 0
  %640 = vmatpush1.bf16.msra.mxu0 0
  %641 = vmatprep.subr.bf16.mxu0 0
  %642 = vmatpush1.bf16.msra.mxu0 0
  %643 = vmatprep.subr.bf16.mxu0 0
  %644 = vmatpush1.bf16.msra.mxu0 0
  %645 = vmatprep.subr.bf16.mxu0 0
  %646 = vmatpush1.bf16.msra.mxu0 0
  %647 = vmatprep.subr.bf16.mxu0 0
  %648 = vmatpush1.bf16.msra.mxu0 0
  %649 = vmatprep.subr.bf16.mxu0 0
  %650 = vmatpush1.bf16.msra.mxu0 %v447
  %651 = vmatprep.subr.bf16.mxu0 0
  %652 = vmatpush1.bf16.msra.mxu0 %v446
  %653 = vmatprep.subr.bf16.mxu0 0
  %654 = vmatpush2.bf16.msra.mxu0 0
  %655 = vmatprep.subr.bf16.mxu0 0
  %656 = vmatpush2.bf16.msra.mxu0 0
  %657 = vmatprep.subr.bf16.mxu0 0
  %658 = vmatpush2.bf16.msra.mxu0 0
  %659 = vmatprep.subr.bf16.mxu0 0
  %660 = vmatpush2.bf16.msra.mxu0 0
  %661 = vmatprep.subr.bf16.mxu0 0
  %662 = vmatpush2.bf16.msra.mxu0 0
  %663 = vmatprep.subr.bf16.mxu0 0
  %664 = vmatpush2.bf16.msra.mxu0 0
  %665 = vmatprep.subr.bf16.mxu0 0
  %666 = vmatpush2.bf16.msra.mxu0 0
  %667 = vmatprep.subr.bf16.mxu0 0
  %668 = vmatpush2.bf16.msra.mxu0 0
  %669 = vmatprep.mubr.bf16.mxu0 0
  %670 = vmatmul.mubr.bf16.gmra.mxu0 %v527
  %v671 = vpop.f32.mrf.mxu0
  %v672 = vadd.f32 %v632, %v671
  %v673 = vpop.f32.mrf.mxu0
  %v674 = vpop.f32.mrf.mxu0
  %v675 = vpop.f32.mrf.mxu0
  %676 = vdwg.mxu0
  %v677 = vadd.f32 %v672, %v494
  %v678 = vtanh.pop %v677
  %v679 = vmul.f32 %v678, 0.5
  %v680 = vadd.f32 %v679, 0.5
  %v681 = vmul.f32 %v680, %v510
  %683 = vrot.lane.b32.xlu0 %v678, 64
  %v684 = vpop.permute.xlu0 %683
  %v686 = vmul.f32 %v680, %v684
  %688 = vrot.lane.b32.xlu0 %v686, 32
  %v689 = vpop.permute.xlu0 %688
  %v691 = vadd.f32 %v681, %v689
  %v692 = vtanh.pop %v691
  %694 = vrot.lane.b32.xlu0 %v692, 64
  %v695 = vpop.permute.xlu0 %694
  %v697 = vmul.f32 %v680, %v695
  %v698 = vpack.c.bf16 %v697, %v697
  %700 = vrot.lane.b32.xlu0 %v697, 32
  %v701 = vpop.permute.xlu0 %700
  %703 = vst.msk [vmem:[#allocation2 + $0x8] sm:$0xff] %vm252, %v701
  %705 = vrot.lane.b32.xlu0 %v590, 32
  %v706 = vpop.permute.xlu0 %705
  %v708 = vsel %vm252, %v706, 0
  %710 = vmatprep.subr.bf16.mxu0 0
  %711 = vmatpush1.bf16.msra.mxu0 0
  %712 = vmatprep.subr.bf16.mxu0 0
  %713 = vmatpush1.bf16.msra.mxu0 0
  %714 = vmatprep.subr.bf16.mxu0 0
  %715 = vmatpush1.bf16.msra.mxu0 0
  %716 = vmatprep.subr.bf16.mxu0 0
  %717 = vmatpush1.bf16.msra.mxu0 0
  %718 = vmatprep.subr.bf16.mxu0 0
  %719 = vmatpush1.bf16.msra.mxu0 0
  %720 = vmatprep.subr.bf16.mxu0 0
  %721 = vmatpush1.bf16.msra.mxu0 0
  %722 = vmatprep.subr.bf16.mxu0 0
  %723 = vmatpush1.bf16.msra.mxu0 %v249
  %724 = vmatprep.subr.bf16.mxu0 0
  %725 = vmatpush1.bf16.msra.mxu0 %v248
  %726 = vmatprep.subr.bf16.mxu0 0
  %727 = vmatpush2.bf16.msra.mxu0 0
  %728 = vmatprep.subr.bf16.mxu0 0
  %729 = vmatpush2.bf16.msra.mxu0 0
  %730 = vmatprep.subr.bf16.mxu0 0
  %731 = vmatpush2.bf16.msra.mxu0 0
  %732 = vmatprep.subr.bf16.mxu0 0
  %733 = vmatpush2.bf16.msra.mxu0 0
  %734 = vmatprep.subr.bf16.mxu0 0
  %735 = vmatpush2.bf16.msra.mxu0 0
  %736 = vmatprep.subr.bf16.mxu0 0
  %737 = vmatpush2.bf16.msra.mxu0 0
  %738 = vmatprep.subr.bf16.mxu0 0
  %739 = vmatpush2.bf16.msra.mxu0 0
  %740 = vmatprep.subr.bf16.mxu0 0
  %741 = vmatpush2.bf16.msra.mxu0 0
  %742 = vmatprep.mubr.bf16.mxu0 0
  %743 = vmatmul.mubr.bf16.gmra.mxu0 %v708
  %v744 = vpop.f32.mrf.mxu0
  %v745 = vadd.f32 0.0, %v744
  %v746 = vpop.f32.mrf.mxu0
  %v747 = vpop.f32.mrf.mxu0
  %v748 = vpop.f32.mrf.mxu0
  %749 = vdwg.mxu0
  %v750 = vadd.f32 %v221, %v745
  %v751 = vtanh.pop %v750
  %v752 = vmul.f32 %v751, 0.5
  %v753 = vadd.f32 %v752, 0.5
  %v754 = vmul.f32 %v753, %v583
  %756 = vrot.lane.b32.xlu0 %v751, 64
  %v757 = vpop.permute.xlu0 %756
  %v759 = vmul.f32 %v753, %v757
  %761 = vrot.lane.b32.xlu0 %v759, 32
  %v762 = vpop.permute.xlu0 %761
  %v764 = vadd.f32 %v754, %v762
  %v765 = vtanh.pop %v764
  %767 = vrot.lane.b32.xlu0 %v765, 64
  %v768 = vpop.permute.xlu0 %767
  %v770 = vmul.f32 %v753, %v768
  %v771 = vpack.c.bf16 %v770, %v770
  %773 = vrot.lane.b32.xlu0 %v698, 32
  %v774 = vpop.permute.xlu0 %773
  %v776 = vsel %vm252, %v774, 0
  %778 = vmatprep.subr.bf16.mxu0 0
  %779 = vmatpush1.bf16.msra.mxu0 0
  %780 = vmatprep.subr.bf16.mxu0 0
  %781 = vmatpush1.bf16.msra.mxu0 0
  %782 = vmatprep.subr.bf16.mxu0 0
  %783 = vmatpush1.bf16.msra.mxu0 0
  %784 = vmatprep.subr.bf16.mxu0 0
  %785 = vmatpush1.bf16.msra.mxu0 0
  %786 = vmatprep.subr.bf16.mxu0 0
  %787 = vmatpush1.bf16.msra.mxu0 0
  %788 = vmatprep.subr.bf16.mxu0 0
  %789 = vmatpush1.bf16.msra.mxu0 0
  %790 = vmatprep.subr.bf16.mxu0 0
  %791 = vmatpush1.bf16.msra.mxu0 %v395
  %792 = vmatprep.subr.bf16.mxu0 0
  %793 = vmatpush1.bf16.msra.mxu0 %v394
  %794 = vmatprep.subr.bf16.mxu0 0
  %795 = vmatpush2.bf16.msra.mxu0 0
  %796 = vmatprep.subr.bf16.mxu0 0
  %797 = vmatpush2.bf16.msra.mxu0 0
  %798 = vmatprep.subr.bf16.mxu0 0
  %799 = vmatpush2.bf16.msra.mxu0 0
  %800 = vmatprep.subr.bf16.mxu0 0
  %801 = vmatpush2.bf16.msra.mxu0 0
  %802 = vmatprep.subr.bf16.mxu0 0
  %803 = vmatpush2.bf16.msra.mxu0 0
  %804 = vmatprep.subr.bf16.mxu0 0
  %805 = vmatpush2.bf16.msra.mxu0 0
  %806 = vmatprep.subr.bf16.mxu0 0
  %807 = vmatpush2.bf16.msra.mxu0 0
  %808 = vmatprep.subr.bf16.mxu0 0
  %809 = vmatpush2.bf16.msra.mxu0 0
  %810 = vmatprep.mubr.bf16.mxu0 0
  %811 = vmatmul.mubr.bf16.gmra.mxu0 %v776
  %v812 = vpop.f32.mrf.mxu0
  %v813 = vadd.f32 0.0, %v812
  %v814 = vpop.f32.mrf.mxu0
  %v815 = vpop.f32.mrf.mxu0
  %v816 = vpop.f32.mrf.mxu0
  %817 = vdwg.mxu0
  %818 = vmatprep.subr.bf16.mxu0 0
  %819 = vmatpush1.bf16.msra.mxu0 0
  %820 = vmatprep.subr.bf16.mxu0 0
  %821 = vmatpush1.bf16.msra.mxu0 0
  %822 = vmatprep.subr.bf16.mxu0 0
  %823 = vmatpush1.bf16.msra.mxu0 0
  %824 = vmatprep.subr.bf16.mxu0 0
  %825 = vmatpush1.bf16.msra.mxu0 0
  %826 = vmatprep.subr.bf16.mxu0 0
  %827 = vmatpush1.bf16.msra.mxu0 0
  %828 = vmatprep.subr.bf16.mxu0 0
  %829 = vmatpush1.bf16.msra.mxu0 0
  %830 = vmatprep.subr.bf16.mxu0 0
  %831 = vmatpush1.bf16.msra.mxu0 %v447
  %832 = vmatprep.subr.bf16.mxu0 0
  %833 = vmatpush1.bf16.msra.mxu0 %v446
  %834 = vmatprep.subr.bf16.mxu0 0
  %835 = vmatpush2.bf16.msra.mxu0 0
  %836 = vmatprep.subr.bf16.mxu0 0
  %837 = vmatpush2.bf16.msra.mxu0 0
  %838 = vmatprep.subr.bf16.mxu0 0
  %839 = vmatpush2.bf16.msra.mxu0 0
  %840 = vmatprep.subr.bf16.mxu0 0
  %841 = vmatpush2.bf16.msra.mxu0 0
  %842 = vmatprep.subr.bf16.mxu0 0
  %843 = vmatpush2.bf16.msra.mxu0 0
  %844 = vmatprep.subr.bf16.mxu0 0
  %845 = vmatpush2.bf16.msra.mxu0 0
  %846 = vmatprep.subr.bf16.mxu0 0
  %847 = vmatpush2.bf16.msra.mxu0 0
  %848 = vmatprep.subr.bf16.mxu0 0
  %849 = vmatpush2.bf16.msra.mxu0 0
  %850 = vmatprep.mubr.bf16.mxu0 0
  %851 = vmatmul.mubr.bf16.gmra.mxu0 %v708
  %v852 = vpop.f32.mrf.mxu0
  %v853 = vadd.f32 %v813, %v852
  %v854 = vpop.f32.mrf.mxu0
  %v855 = vpop.f32.mrf.mxu0
  %v856 = vpop.f32.mrf.mxu0
  %857 = vdwg.mxu0
  %v858 = vadd.f32 %v853, %v494
  %v859 = vtanh.pop %v858
  %v860 = vmul.f32 %v859, 0.5
  %v861 = vadd.f32 %v860, 0.5
  %v862 = vmul.f32 %v861, %v691
  %864 = vrot.lane.b32.xlu0 %v859, 64
  %v865 = vpop.permute.xlu0 %864
  %v867 = vmul.f32 %v861, %v865
  %869 = vrot.lane.b32.xlu0 %v867, 32
  %v870 = vpop.permute.xlu0 %869
  %v872 = vadd.f32 %v862, %v870
  %v873 = vtanh.pop %v872
  %875 = vrot.lane.b32.xlu0 %v873, 64
  %v876 = vpop.permute.xlu0 %875
  %v878 = vmul.f32 %v861, %v876
  %v879 = vpack.c.bf16 %v878, %v878
  %881 = vrot.lane.b32.xlu0 %v878, 32
  %v882 = vpop.permute.xlu0 %881
  %884 = vst.msk [vmem:[#allocation2 + $0x10] sm:$0xff] %vm252, %v882
  %886 = vrot.lane.b32.xlu0 %v771, 32
  %v887 = vpop.permute.xlu0 %886
  %v889 = vsel %vm252, %v887, 0
  %891 = vmatprep.subr.bf16.mxu0 0
  %892 = vmatpush1.bf16.msra.mxu0 0
  %893 = vmatprep.subr.bf16.mxu0 0
  %894 = vmatpush1.bf16.msra.mxu0 0
  %895 = vmatprep.subr.bf16.mxu0 0
  %896 = vmatpush1.bf16.msra.mxu0 0
  %897 = vmatprep.subr.bf16.mxu0 0
  %898 = vmatpush1.bf16.msra.mxu0 0
  %899 = vmatprep.subr.bf16.mxu0 0
  %900 = vmatpush1.bf16.msra.mxu0 0
  %901 = vmatprep.subr.bf16.mxu0 0
  %902 = vmatpush1.bf16.msra.mxu0 0
  %903 = vmatprep.subr.bf16.mxu0 0
  %904 = vmatpush1.bf16.msra.mxu0 %v249
  %905 = vmatprep.subr.bf16.mxu0 0
  %906 = vmatpush1.bf16.msra.mxu0 %v248
  %907 = vmatprep.subr.bf16.mxu0 0
  %908 = vmatpush2.bf16.msra.mxu0 0
  %909 = vmatprep.subr.bf16.mxu0 0
  %910 = vmatpush2.bf16.msra.mxu0 0
  %911 = vmatprep.subr.bf16.mxu0 0
  %912 = vmatpush2.bf16.msra.mxu0 0
  %913 = vmatprep.subr.bf16.mxu0 0
  %914 = vmatpush2.bf16.msra.mxu0 0
  %915 = vmatprep.subr.bf16.mxu0 0
  %916 = vmatpush2.bf16.msra.mxu0 0
  %917 = vmatprep.subr.bf16.mxu0 0
  %918 = vmatpush2.bf16.msra.mxu0 0
  %919 = vmatprep.subr.bf16.mxu0 0
  %920 = vmatpush2.bf16.msra.mxu0 0
  %921 = vmatprep.subr.bf16.mxu0 0
  %922 = vmatpush2.bf16.msra.mxu0 0
  %923 = vmatprep.mubr.bf16.mxu0 0
  %924 = vmatmul.mubr.bf16.gmra.mxu0 %v889
  %v925 = vpop.f32.mrf.mxu0
  %v926 = vadd.f32 0.0, %v925
  %v927 = vpop.f32.mrf.mxu0
  %v928 = vpop.f32.mrf.mxu0
  %v929 = vpop.f32.mrf.mxu0
  %930 = vdwg.mxu0
  %v931 = vadd.f32 %v226, %v926
  %v932 = vtanh.pop %v931
  %v933 = vmul.f32 %v932, 0.5
  %v934 = vadd.f32 %v933, 0.5
  %v935 = vmul.f32 %v934, %v764
  %937 = vrot.lane.b32.xlu0 %v932, 64
  %v938 = vpop.permute.xlu0 %937
  %v940 = vmul.f32 %v934, %v938
  %942 = vrot.lane.b32.xlu0 %v940, 32
  %v943 = vpop.permute.xlu0 %942
  %v945 = vadd.f32 %v935, %v943
  %v946 = vtanh.pop %v945
  %948 = vrot.lane.b32.xlu0 %v946, 64
  %v949 = vpop.permute.xlu0 %948
  %v951 = vmul.f32 %v934, %v949
  %v952 = vpack.c.bf16 %v951, %v951
  %954 = vrot.lane.b32.xlu0 %v879, 32
  %v955 = vpop.permute.xlu0 %954
  %v957 = vsel %vm252, %v955, 0
  %959 = vmatprep.subr.bf16.mxu0 0
  %960 = vmatpush1.bf16.msra.mxu0 0
  %961 = vmatprep.subr.bf16.mxu0 0
  %962 = vmatpush1.bf16.msra.mxu0 0
  %963 = vmatprep.subr.bf16.mxu0 0
  %964 = vmatpush1.bf16.msra.mxu0 0
  %965 = vmatprep.subr.bf16.mxu0 0
  %966 = vmatpush1.bf16.msra.mxu0 0
  %967 = vmatprep.subr.bf16.mxu0 0
  %968 = vmatpush1.bf16.msra.mxu0 0
  %969 = vmatprep.subr.bf16.mxu0 0
  %970 = vmatpush1.bf16.msra.mxu0 0
  %971 = vmatprep.subr.bf16.mxu0 0
  %972 = vmatpush1.bf16.msra.mxu0 %v395
  %973 = vmatprep.subr.bf16.mxu0 0
  %974 = vmatpush1.bf16.msra.mxu0 %v394
  %975 = vmatprep.subr.bf16.mxu0 0
  %976 = vmatpush2.bf16.msra.mxu0 0
  %977 = vmatprep.subr.bf16.mxu0 0
  %978 = vmatpush2.bf16.msra.mxu0 0
  %979 = vmatprep.subr.bf16.mxu0 0
  %980 = vmatpush2.bf16.msra.mxu0 0
  %981 = vmatprep.subr.bf16.mxu0 0
  %982 = vmatpush2.bf16.msra.mxu0 0
  %983 = vmatprep.subr.bf16.mxu0 0
  %984 = vmatpush2.bf16.msra.mxu0 0
  %985 = vmatprep.subr.bf16.mxu0 0
  %986 = vmatpush2.bf16.msra.mxu0 0
  %987 = vmatprep.subr.bf16.mxu0 0
  %988 = vmatpush2.bf16.msra.mxu0 0
  %989 = vmatprep.subr.bf16.mxu0 0
  %990 = vmatpush2.bf16.msra.mxu0 0
  %991 = vmatprep.mubr.bf16.mxu0 0
  %992 = vmatmul.mubr.bf16.gmra.mxu0 %v957
  %v993 = vpop.f32.mrf.mxu0
  %v994 = vadd.f32 0.0, %v993
  %v995 = vpop.f32.mrf.mxu0
  %v996 = vpop.f32.mrf.mxu0
  %v997 = vpop.f32.mrf.mxu0
  %998 = vdwg.mxu0
  %999 = vmatprep.subr.bf16.mxu0 0
  %1000 = vmatpush1.bf16.msra.mxu0 0
  %1001 = vmatprep.subr.bf16.mxu0 0
  %1002 = vmatpush1.bf16.msra.mxu0 0
  %1003 = vmatprep.subr.bf16.mxu0 0
  %1004 = vmatpush1.bf16.msra.mxu0 0
  %1005 = vmatprep.subr.bf16.mxu0 0
  %1006 = vmatpush1.bf16.msra.mxu0 0
  %1007 = vmatprep.subr.bf16.mxu0 0
  %1008 = vmatpush1.bf16.msra.mxu0 0
  %1009 = vmatprep.subr.bf16.mxu0 0
  %1010 = vmatpush1.bf16.msra.mxu0 0
  %1011 = vmatprep.subr.bf16.mxu0 0
  %1012 = vmatpush1.bf16.msra.mxu0 %v447
  %1013 = vmatprep.subr.bf16.mxu0 0
  %1014 = vmatpush1.bf16.msra.mxu0 %v446
  %1015 = vmatprep.subr.bf16.mxu0 0
  %1016 = vmatpush2.bf16.msra.mxu0 0
  %1017 = vmatprep.subr.bf16.mxu0 0
  %1018 = vmatpush2.bf16.msra.mxu0 0
  %1019 = vmatprep.subr.bf16.mxu0 0
  %1020 = vmatpush2.bf16.msra.mxu0 0
  %1021 = vmatprep.subr.bf16.mxu0 0
  %1022 = vmatpush2.bf16.msra.mxu0 0
  %1023 = vmatprep.subr.bf16.mxu0 0
  %1024 = vmatpush2.bf16.msra.mxu0 0
  %1025 = vmatprep.subr.bf16.mxu0 0
  %1026 = vmatpush2.bf16.msra.mxu0 0
  %1027 = vmatprep.subr.bf16.mxu0 0
  %1028 = vmatpush2.bf16.msra.mxu0 0
  %1029 = vmatprep.subr.bf16.mxu0 0
  %1030 = vmatpush2.bf16.msra.mxu0 0
  %1031 = vmatprep.mubr.bf16.mxu0 0
  %1032 = vmatmul.mubr.bf16.gmra.mxu0 %v889
  %v1033 = vpop.f32.mrf.mxu0
  %v1034 = vadd.f32 %v994, %v1033
  %v1035 = vpop.f32.mrf.mxu0
  %v1036 = vpop.f32.mrf.mxu0
  %v1037 = vpop.f32.mrf.mxu0
  %1038 = vdwg.mxu0
  %v1039 = vadd.f32 %v1034, %v494
  %v1040 = vtanh.pop %v1039
  %v1041 = vmul.f32 %v1040, 0.5
  %v1042 = vadd.f32 %v1041, 0.5
  %v1043 = vmul.f32 %v1042, %v872
  %1045 = vrot.lane.b32.xlu0 %v1040, 64
  %v1046 = vpop.permute.xlu0 %1045
  %v1048 = vmul.f32 %v1042, %v1046
  %1050 = vrot.lane.b32.xlu0 %v1048, 32
  %v1051 = vpop.permute.xlu0 %1050
  %v1053 = vadd.f32 %v1043, %v1051
  %v1054 = vtanh.pop %v1053
  %1056 = vrot.lane.b32.xlu0 %v1054, 64
  %v1057 = vpop.permute.xlu0 %1056
  %v1059 = vmul.f32 %v1042, %v1057
  %v1060 = vpack.c.bf16 %v1059, %v1059
  %1062 = vrot.lane.b32.xlu0 %v1059, 32
  %v1063 = vpop.permute.xlu0 %1062
  %1065 = vst.msk [vmem:[#allocation2 + $0x18] sm:$0xff] %vm252, %v1063
  %1067 = vrot.lane.b32.xlu0 %v952, 32
  %v1068 = vpop.permute.xlu0 %1067
  %v1070 = vsel %vm252, %v1068, 0
  %1072 = vmatprep.subr.bf16.mxu0 0
  %1073 = vmatpush1.bf16.msra.mxu0 0
  %1074 = vmatprep.subr.bf16.mxu0 0
  %1075 = vmatpush1.bf16.msra.mxu0 0
  %1076 = vmatprep.subr.bf16.mxu0 0
  %1077 = vmatpush1.bf16.msra.mxu0 0
  %1078 = vmatprep.subr.bf16.mxu0 0
  %1079 = vmatpush1.bf16.msra.mxu0 0
  %1080 = vmatprep.subr.bf16.mxu0 0
  %1081 = vmatpush1.bf16.msra.mxu0 0
  %1082 = vmatprep.subr.bf16.mxu0 0
  %1083 = vmatpush1.bf16.msra.mxu0 0
  %1084 = vmatprep.subr.bf16.mxu0 0
  %1085 = vmatpush1.bf16.msra.mxu0 %v249
  %1086 = vmatprep.subr.bf16.mxu0 0
  %1087 = vmatpush1.bf16.msra.mxu0 %v248
  %1088 = vmatprep.subr.bf16.mxu0 0
  %1089 = vmatpush2.bf16.msra.mxu0 0
  %1090 = vmatprep.subr.bf16.mxu0 0
  %1091 = vmatpush2.bf16.msra.mxu0 0
  %1092 = vmatprep.subr.bf16.mxu0 0
  %1093 = vmatpush2.bf16.msra.mxu0 0
  %1094 = vmatprep.subr.bf16.mxu0 0
  %1095 = vmatpush2.bf16.msra.mxu0 0
  %1096 = vmatprep.subr.bf16.mxu0 0
  %1097 = vmatpush2.bf16.msra.mxu0 0
  %1098 = vmatprep.subr.bf16.mxu0 0
  %1099 = vmatpush2.bf16.msra.mxu0 0
  %1100 = vmatprep.subr.bf16.mxu0 0
  %1101 = vmatpush2.bf16.msra.mxu0 0
  %1102 = vmatprep.subr.bf16.mxu0 0
  %1103 = vmatpush2.bf16.msra.mxu0 0
  %1104 = vmatprep.mubr.bf16.mxu0 0
  %1105 = vmatmul.mubr.bf16.gmra.mxu0 %v1070
  %v1106 = vpop.f32.mrf.mxu0
  %v1107 = vadd.f32 0.0, %v1106
  %v1108 = vpop.f32.mrf.mxu0
  %v1109 = vpop.f32.mrf.mxu0
  %v1110 = vpop.f32.mrf.mxu0
  %1111 = vdwg.mxu0
  %v1112 = vadd.f32 %v229, %v1107
  %v1113 = vtanh.pop %v1112
  %v1114 = vmul.f32 %v1113, 0.5
  %v1115 = vadd.f32 %v1114, 0.5
  %v1116 = vmul.f32 %v1115, %v945
  %1118 = vrot.lane.b32.xlu0 %v1113, 64
  %v1119 = vpop.permute.xlu0 %1118
  %v1121 = vmul.f32 %v1115, %v1119
  %1123 = vrot.lane.b32.xlu0 %v1121, 32
  %v1124 = vpop.permute.xlu0 %1123
  %v1126 = vadd.f32 %v1116, %v1124
  %v1127 = vtanh.pop %v1126
  %1129 = vrot.lane.b32.xlu0 %v1127, 64
  %v1130 = vpop.permute.xlu0 %1129
  %v1132 = vmul.f32 %v1115, %v1130
  %v1133 = vpack.c.bf16 %v1132, %v1132
  %1135 = vrot.lane.b32.xlu0 %v1060, 32
  %v1136 = vpop.permute.xlu0 %1135
  %v1138 = vsel %vm252, %v1136, 0
  %1140 = vmatprep.subr.bf16.mxu0 0
  %1141 = vmatpush1.bf16.msra.mxu0 0
  %1142 = vmatprep.subr.bf16.mxu0 0
  %1143 = vmatpush1.bf16.msra.mxu0 0
  %1144 = vmatprep.subr.bf16.mxu0 0
  %1145 = vmatpush1.bf16.msra.mxu0 0
  %1146 = vmatprep.subr.bf16.mxu0 0
  %1147 = vmatpush1.bf16.msra.mxu0 0
  %1148 = vmatprep.subr.bf16.mxu0 0
  %1149 = vmatpush1.bf16.msra.mxu0 0
  %1150 = vmatprep.subr.bf16.mxu0 0
  %1151 = vmatpush1.bf16.msra.mxu0 0
  %1152 = vmatprep.subr.bf16.mxu0 0
  %1153 = vmatpush1.bf16.msra.mxu0 %v395
  %1154 = vmatprep.subr.bf16.mxu0 0
  %1155 = vmatpush1.bf16.msra.mxu0 %v394
  %1156 = vmatprep.subr.bf16.mxu0 0
  %1157 = vmatpush2.bf16.msra.mxu0 0
  %1158 = vmatprep.subr.bf16.mxu0 0
  %1159 = vmatpush2.bf16.msra.mxu0 0
  %1160 = vmatprep.subr.bf16.mxu0 0
  %1161 = vmatpush2.bf16.msra.mxu0 0
  %1162 = vmatprep.subr.bf16.mxu0 0
  %1163 = vmatpush2.bf16.msra.mxu0 0
  %1164 = vmatprep.subr.bf16.mxu0 0
  %1165 = vmatpush2.bf16.msra.mxu0 0
  %1166 = vmatprep.subr.bf16.mxu0 0
  %1167 = vmatpush2.bf16.msra.mxu0 0
  %1168 = vmatprep.subr.bf16.mxu0 0
  %1169 = vmatpush2.bf16.msra.mxu0 0
  %1170 = vmatprep.subr.bf16.mxu0 0
  %1171 = vmatpush2.bf16.msra.mxu0 0
  %1172 = vmatprep.mubr.bf16.mxu0 0
  %1173 = vmatmul.mubr.bf16.gmra.mxu0 %v1138
  %v1174 = vpop.f32.mrf.mxu0
  %v1175 = vadd.f32 0.0, %v1174
  %v1176 = vpop.f32.mrf.mxu0
  %v1177 = vpop.f32.mrf.mxu0
  %v1178 = vpop.f32.mrf.mxu0
  %1179 = vdwg.mxu0
  %1180 = vmatprep.subr.bf16.mxu0 0
  %1181 = vmatpush1.bf16.msra.mxu0 0
  %1182 = vmatprep.subr.bf16.mxu0 0
  %1183 = vmatpush1.bf16.msra.mxu0 0
  %1184 = vmatprep.subr.bf16.mxu0 0
  %1185 = vmatpush1.bf16.msra.mxu0 0
  %1186 = vmatprep.subr.bf16.mxu0 0
  %1187 = vmatpush1.bf16.msra.mxu0 0
  %1188 = vmatprep.subr.bf16.mxu0 0
  %1189 = vmatpush1.bf16.msra.mxu0 0
  %1190 = vmatprep.subr.bf16.mxu0 0
  %1191 = vmatpush1.bf16.msra.mxu0 0
  %1192 = vmatprep.subr.bf16.mxu0 0
  %1193 = vmatpush1.bf16.msra.mxu0 %v447
  %1194 = vmatprep.subr.bf16.mxu0 0
  %1195 = vmatpush1.bf16.msra.mxu0 %v446
  %1196 = vmatprep.subr.bf16.mxu0 0
  %1197 = vmatpush2.bf16.msra.mxu0 0
  %1198 = vmatprep.subr.bf16.mxu0 0
  %1199 = vmatpush2.bf16.msra.mxu0 0
  %1200 = vmatprep.subr.bf16.mxu0 0
  %1201 = vmatpush2.bf16.msra.mxu0 0
  %1202 = vmatprep.subr.bf16.mxu0 0
  %1203 = vmatpush2.bf16.msra.mxu0 0
  %1204 = vmatprep.subr.bf16.mxu0 0
  %1205 = vmatpush2.bf16.msra.mxu0 0
  %1206 = vmatprep.subr.bf16.mxu0 0
  %1207 = vmatpush2.bf16.msra.mxu0 0
  %1208 = vmatprep.subr.bf16.mxu0 0
  %1209 = vmatpush2.bf16.msra.mxu0 0
  %1210 = vmatprep.subr.bf16.mxu0 0
  %1211 = vmatpush2.bf16.msra.mxu0 0
  %1212 = vmatprep.mubr.bf16.mxu0 0
  %1213 = vmatmul.mubr.bf16.gmra.mxu0 %v1070
  %v1214 = vpop.f32.mrf.mxu0
  %v1215 = vadd.f32 %v1175, %v1214
  %v1216 = vpop.f32.mrf.mxu0
  %v1217 = vpop.f32.mrf.mxu0
  %v1218 = vpop.f32.mrf.mxu0
  %1219 = vdwg.mxu0
  %v1220 = vadd.f32 %v1215, %v494
  %v1221 = vtanh.pop %v1220
  %v1222 = vmul.f32 %v1221, 0.5
  %v1223 = vadd.f32 %v1222, 0.5
  %v1224 = vmul.f32 %v1223, %v1053
  %1226 = vrot.lane.b32.xlu0 %v1221, 64
  %v1227 = vpop.permute.xlu0 %1226
  %v1229 = vmul.f32 %v1223, %v1227
  %1231 = vrot.lane.b32.xlu0 %v1229, 32
  %v1232 = vpop.permute.xlu0 %1231
  %v1234 = vadd.f32 %v1224, %v1232
  %v1235 = vtanh.pop %v1234
  %1237 = vrot.lane.b32.xlu0 %v1235, 64
  %v1238 = vpop.permute.xlu0 %1237
  %v1240 = vmul.f32 %v1223, %v1238
  %v1241 = vpack.c.bf16 %v1240, %v1240
  %1243 = vrot.lane.b32.xlu0 %v1240, 32
  %v1244 = vpop.permute.xlu0 %1243
  %1246 = vst.msk [vmem:[#allocation2 + $0x20] sm:$0xff] %vm252, %v1244
  %1248 = vrot.lane.b32.xlu0 %v1133, 32
  %v1249 = vpop.permute.xlu0 %1248
  %v1251 = vsel %vm252, %v1249, 0
  %1253 = vmatprep.subr.bf16.mxu0 0
  %1254 = vmatpush1.bf16.msra.mxu0 0
  %1255 = vmatprep.subr.bf16.mxu0 0
  %1256 = vmatpush1.bf16.msra.mxu0 0
  %1257 = vmatprep.subr.bf16.mxu0 0
  %1258 = vmatpush1.bf16.msra.mxu0 0
  %1259 = vmatprep.subr.bf16.mxu0 0
  %1260 = vmatpush1.bf16.msra.mxu0 0
  %1261 = vmatprep.subr.bf16.mxu0 0
  %1262 = vmatpush1.bf16.msra.mxu0 0
  %1263 = vmatprep.subr.bf16.mxu0 0
  %1264 = vmatpush1.bf16.msra.mxu0 0
  %1265 = vmatprep.subr.bf16.mxu0 0
  %1266 = vmatpush1.bf16.msra.mxu0 %v249
  %1267 = vmatprep.subr.bf16.mxu0 0
  %1268 = vmatpush1.bf16.msra.mxu0 %v248
  %1269 = vmatprep.subr.bf16.mxu0 0
  %1270 = vmatpush2.bf16.msra.mxu0 0
  %1271 = vmatprep.subr.bf16.mxu0 0
  %1272 = vmatpush2.bf16.msra.mxu0 0
  %1273 = vmatprep.subr.bf16.mxu0 0
  %1274 = vmatpush2.bf16.msra.mxu0 0
  %1275 = vmatprep.subr.bf16.mxu0 0
  %1276 = vmatpush2.bf16.msra.mxu0 0
  %1277 = vmatprep.subr.bf16.mxu0 0
  %1278 = vmatpush2.bf16.msra.mxu0 0
  %1279 = vmatprep.subr.bf16.mxu0 0
  %1280 = vmatpush2.bf16.msra.mxu0 0
  %1281 = vmatprep.subr.bf16.mxu0 0
  %1282 = vmatpush2.bf16.msra.mxu0 0
  %1283 = vmatprep.subr.bf16.mxu0 0
  %1284 = vmatpush2.bf16.msra.mxu0 0
  %1285 = vmatprep.mubr.bf16.mxu0 0
  %1286 = vmatmul.mubr.bf16.gmra.mxu0 %v1251
  %v1287 = vpop.f32.mrf.mxu0
  %v1288 = vadd.f32 0.0, %v1287
  %v1289 = vpop.f32.mrf.mxu0
  %v1290 = vpop.f32.mrf.mxu0
  %v1291 = vpop.f32.mrf.mxu0
  %1292 = vdwg.mxu0
  %v1293 = vadd.f32 %v234, %v1288
  %v1294 = vtanh.pop %v1293
  %v1295 = vmul.f32 %v1294, 0.5
  %v1296 = vadd.f32 %v1295, 0.5
  %v1297 = vmul.f32 %v1296, %v1126
  %1299 = vrot.lane.b32.xlu0 %v1294, 64
  %v1300 = vpop.permute.xlu0 %1299
  %v1302 = vmul.f32 %v1296, %v1300
  %1304 = vrot.lane.b32.xlu0 %v1302, 32
  %v1305 = vpop.permute.xlu0 %1304
  %v1307 = vadd.f32 %v1297, %v1305
  %v1308 = vtanh.pop %v1307
  %1310 = vrot.lane.b32.xlu0 %v1308, 64
  %v1311 = vpop.permute.xlu0 %1310
  %v1313 = vmul.f32 %v1296, %v1311
  %v1314 = vpack.c.bf16 %v1313, %v1313
  %1316 = vrot.lane.b32.xlu0 %v1241, 32
  %v1317 = vpop.permute.xlu0 %1316
  %v1319 = vsel %vm252, %v1317, 0
  %1321 = vmatprep.subr.bf16.mxu0 0
  %1322 = vmatpush1.bf16.msra.mxu0 0
  %1323 = vmatprep.subr.bf16.mxu0 0
  %1324 = vmatpush1.bf16.msra.mxu0 0
  %1325 = vmatprep.subr.bf16.mxu0 0
  %1326 = vmatpush1.bf16.msra.mxu0 0
  %1327 = vmatprep.subr.bf16.mxu0 0
  %1328 = vmatpush1.bf16.msra.mxu0 0
  %1329 = vmatprep.subr.bf16.mxu0 0
  %1330 = vmatpush1.bf16.msra.mxu0 0
  %1331 = vmatprep.subr.bf16.mxu0 0
  %1332 = vmatpush1.bf16.msra.mxu0 0
  %1333 = vmatprep.subr.bf16.mxu0 0
  %1334 = vmatpush1.bf16.msra.mxu0 %v395
  %1335 = vmatprep.subr.bf16.mxu0 0
  %1336 = vmatpush1.bf16.msra.mxu0 %v394
  %1337 = vmatprep.subr.bf16.mxu0 0
  %1338 = vmatpush2.bf16.msra.mxu0 0
  %1339 = vmatprep.subr.bf16.mxu0 0
  %1340 = vmatpush2.bf16.msra.mxu0 0
  %1341 = vmatprep.subr.bf16.mxu0 0
  %1342 = vmatpush2.bf16.msra.mxu0 0
  %1343 = vmatprep.subr.bf16.mxu0 0
  %1344 = vmatpush2.bf16.msra.mxu0 0
  %1345 = vmatprep.subr.bf16.mxu0 0
  %1346 = vmatpush2.bf16.msra.mxu0 0
  %1347 = vmatprep.subr.bf16.mxu0 0
  %1348 = vmatpush2.bf16.msra.mxu0 0
  %1349 = vmatprep.subr.bf16.mxu0 0
  %1350 = vmatpush2.bf16.msra.mxu0 0
  %1351 = vmatprep.subr.bf16.mxu0 0
  %1352 = vmatpush2.bf16.msra.mxu0 0
  %1353 = vmatprep.mubr.bf16.mxu0 0
  %1354 = vmatmul.mubr.bf16.gmra.mxu0 %v1319
  %v1355 = vpop.f32.mrf.mxu0
  %v1356 = vadd.f32 0.0, %v1355
  %v1357 = vpop.f32.mrf.mxu0
  %v1358 = vpop.f32.mrf.mxu0
  %v1359 = vpop.f32.mrf.mxu0
  %1360 = vdwg.mxu0
  %1361 = vmatprep.subr.bf16.mxu0 0
  %1362 = vmatpush1.bf16.msra.mxu0 0
  %1363 = vmatprep.subr.bf16.mxu0 0
  %1364 = vmatpush1.bf16.msra.mxu0 0
  %1365 = vmatprep.subr.bf16.mxu0 0
  %1366 = vmatpush1.bf16.msra.mxu0 0
  %1367 = vmatprep.subr.bf16.mxu0 0
  %1368 = vmatpush1.bf16.msra.mxu0 0
  %1369 = vmatprep.subr.bf16.mxu0 0
  %1370 = vmatpush1.bf16.msra.mxu0 0
  %1371 = vmatprep.subr.bf16.mxu0 0
  %1372 = vmatpush1.bf16.msra.mxu0 0
  %1373 = vmatprep.subr.bf16.mxu0 0
  %1374 = vmatpush1.bf16.msra.mxu0 %v447
  %1375 = vmatprep.subr.bf16.mxu0 0
  %1376 = vmatpush1.bf16.msra.mxu0 %v446
  %1377 = vmatprep.subr.bf16.mxu0 0
  %1378 = vmatpush2.bf16.msra.mxu0 0
  %1379 = vmatprep.subr.bf16.mxu0 0
  %1380 = vmatpush2.bf16.msra.mxu0 0
  %1381 = vmatprep.subr.bf16.mxu0 0
  %1382 = vmatpush2.bf16.msra.mxu0 0
  %1383 = vmatprep.subr.bf16.mxu0 0
  %1384 = vmatpush2.bf16.msra.mxu0 0
  %1385 = vmatprep.subr.bf16.mxu0 0
  %1386 = vmatpush2.bf16.msra.mxu0 0
  %1387 = vmatprep.subr.bf16.mxu0 0
  %1388 = vmatpush2.bf16.msra.mxu0 0
  %1389 = vmatprep.subr.bf16.mxu0 0
  %1390 = vmatpush2.bf16.msra.mxu0 0
  %1391 = vmatprep.subr.bf16.mxu0 0
  %1392 = vmatpush2.bf16.msra.mxu0 0
  %1393 = vmatprep.mubr.bf16.mxu0 0
  %1394 = vmatmul.mubr.bf16.gmra.mxu0 %v1251
  %v1395 = vpop.f32.mrf.mxu0
  %v1396 = vadd.f32 %v1356, %v1395
  %v1397 = vpop.f32.mrf.mxu0
  %v1398 = vpop.f32.mrf.mxu0
  %v1399 = vpop.f32.mrf.mxu0
  %1400 = vdwg.mxu0
  %v1401 = vadd.f32 %v1396, %v494
  %v1402 = vtanh.pop %v1401
  %v1403 = vmul.f32 %v1402, 0.5
  %v1404 = vadd.f32 %v1403, 0.5
  %v1405 = vmul.f32 %v1404, %v1234
  %1407 = vrot.lane.b32.xlu0 %v1402, 64
  %v1408 = vpop.permute.xlu0 %1407
  %v1410 = vmul.f32 %v1404, %v1408
  %1412 = vrot.lane.b32.xlu0 %v1410, 32
  %v1413 = vpop.permute.xlu0 %1412
  %v1415 = vadd.f32 %v1405, %v1413
  %v1416 = vtanh.pop %v1415
  %1418 = vrot.lane.b32.xlu0 %v1416, 64
  %v1419 = vpop.permute.xlu0 %1418
  %v1421 = vmul.f32 %v1404, %v1419
  %v1422 = vpack.c.bf16 %v1421, %v1421
  %1424 = vrot.lane.b32.xlu0 %v1421, 32
  %v1425 = vpop.permute.xlu0 %1424
  %1427 = vst.msk [vmem:[#allocation2 + $0x28] sm:$0xff] %vm252, %v1425
  %1429 = vrot.lane.b32.xlu0 %v1314, 32
  %v1430 = vpop.permute.xlu0 %1429
  %v1432 = vsel %vm252, %v1430, 0
  %1434 = vmatprep.subr.bf16.mxu0 0
  %1435 = vmatpush1.bf16.msra.mxu0 0
  %1436 = vmatprep.subr.bf16.mxu0 0
  %1437 = vmatpush1.bf16.msra.mxu0 0
  %1438 = vmatprep.subr.bf16.mxu0 0
  %1439 = vmatpush1.bf16.msra.mxu0 0
  %1440 = vmatprep.subr.bf16.mxu0 0
  %1441 = vmatpush1.bf16.msra.mxu0 0
  %1442 = vmatprep.subr.bf16.mxu0 0
  %1443 = vmatpush1.bf16.msra.mxu0 0
  %1444 = vmatprep.subr.bf16.mxu0 0
  %1445 = vmatpush1.bf16.msra.mxu0 0
  %1446 = vmatprep.subr.bf16.mxu0 0
  %1447 = vmatpush1.bf16.msra.mxu0 %v249
  %1448 = vmatprep.subr.bf16.mxu0 0
  %1449 = vmatpush1.bf16.msra.mxu0 %v248
  %1450 = vmatprep.subr.bf16.mxu0 0
  %1451 = vmatpush2.bf16.msra.mxu0 0
  %1452 = vmatprep.subr.bf16.mxu0 0
  %1453 = vmatpush2.bf16.msra.mxu0 0
  %1454 = vmatprep.subr.bf16.mxu0 0
  %1455 = vmatpush2.bf16.msra.mxu0 0
  %1456 = vmatprep.subr.bf16.mxu0 0
  %1457 = vmatpush2.bf16.msra.mxu0 0
  %1458 = vmatprep.subr.bf16.mxu0 0
  %1459 = vmatpush2.bf16.msra.mxu0 0
  %1460 = vmatprep.subr.bf16.mxu0 0
  %1461 = vmatpush2.bf16.msra.mxu0 0
  %1462 = vmatprep.subr.bf16.mxu0 0
  %1463 = vmatpush2.bf16.msra.mxu0 0
  %1464 = vmatprep.subr.bf16.mxu0 0
  %1465 = vmatpush2.bf16.msra.mxu0 0
  %1466 = vmatprep.mubr.bf16.mxu0 0
  %1467 = vmatmul.mubr.bf16.gmra.mxu0 %v1432
  %v1468 = vpop.f32.mrf.mxu0
  %v1469 = vadd.f32 0.0, %v1468
  %v1470 = vpop.f32.mrf.mxu0
  %v1471 = vpop.f32.mrf.mxu0
  %v1472 = vpop.f32.mrf.mxu0
  %1473 = vdwg.mxu0
  %v1474 = vadd.f32 %v237, %v1469
  %v1475 = vtanh.pop %v1474
  %v1476 = vmul.f32 %v1475, 0.5
  %v1477 = vadd.f32 %v1476, 0.5
  %v1478 = vmul.f32 %v1477, %v1307
  %1480 = vrot.lane.b32.xlu0 %v1475, 64
  %v1481 = vpop.permute.xlu0 %1480
  %v1483 = vmul.f32 %v1477, %v1481
  %1485 = vrot.lane.b32.xlu0 %v1483, 32
  %v1486 = vpop.permute.xlu0 %1485
  %v1488 = vadd.f32 %v1478, %v1486
  %v1489 = vtanh.pop %v1488
  %1491 = vrot.lane.b32.xlu0 %v1489, 64
  %v1492 = vpop.permute.xlu0 %1491
  %v1494 = vmul.f32 %v1477, %v1492
  %v1495 = vpack.c.bf16 %v1494, %v1494
  %1497 = vrot.lane.b32.xlu0 %v1422, 32
  %v1498 = vpop.permute.xlu0 %1497
  %v1500 = vsel %vm252, %v1498, 0
  %1502 = vmatprep.subr.bf16.mxu0 0
  %1503 = vmatpush1.bf16.msra.mxu0 0
  %1504 = vmatprep.subr.bf16.mxu0 0
  %1505 = vmatpush1.bf16.msra.mxu0 0
  %1506 = vmatprep.subr.bf16.mxu0 0
  %1507 = vmatpush1.bf16.msra.mxu0 0
  %1508 = vmatprep.subr.bf16.mxu0 0
  %1509 = vmatpush1.bf16.msra.mxu0 0
  %1510 = vmatprep.subr.bf16.mxu0 0
  %1511 = vmatpush1.bf16.msra.mxu0 0
  %1512 = vmatprep.subr.bf16.mxu0 0
  %1513 = vmatpush1.bf16.msra.mxu0 0
  %1514 = vmatprep.subr.bf16.mxu0 0
  %1515 = vmatpush1.bf16.msra.mxu0 %v395
  %1516 = vmatprep.subr.bf16.mxu0 0
  %1517 = vmatpush1.bf16.msra.mxu0 %v394
  %1518 = vmatprep.subr.bf16.mxu0 0
  %1519 = vmatpush2.bf16.msra.mxu0 0
  %1520 = vmatprep.subr.bf16.mxu0 0
  %1521 = vmatpush2.bf16.msra.mxu0 0
  %1522 = vmatprep.subr.bf16.mxu0 0
  %1523 = vmatpush2.bf16.msra.mxu0 0
  %1524 = vmatprep.subr.bf16.mxu0 0
  %1525 = vmatpush2.bf16.msra.mxu0 0
  %1526 = vmatprep.subr.bf16.mxu0 0
  %1527 = vmatpush2.bf16.msra.mxu0 0
  %1528 = vmatprep.subr.bf16.mxu0 0
  %1529 = vmatpush2.bf16.msra.mxu0 0
  %1530 = vmatprep.subr.bf16.mxu0 0
  %1531 = vmatpush2.bf16.msra.mxu0 0
  %1532 = vmatprep.subr.bf16.mxu0 0
  %1533 = vmatpush2.bf16.msra.mxu0 0
  %1534 = vmatprep.mubr.bf16.mxu0 0
  %1535 = vmatmul.mubr.bf16.gmra.mxu0 %v1500
  %v1536 = vpop.f32.mrf.mxu0
  %v1537 = vadd.f32 0.0, %v1536
  %v1538 = vpop.f32.mrf.mxu0
  %v1539 = vpop.f32.mrf.mxu0
  %v1540 = vpop.f32.mrf.mxu0
  %1541 = vdwg.mxu0
  %1542 = vmatprep.subr.bf16.mxu0 0
  %1543 = vmatpush1.bf16.msra.mxu0 0
  %1544 = vmatprep.subr.bf16.mxu0 0
  %1545 = vmatpush1.bf16.msra.mxu0 0
  %1546 = vmatprep.subr.bf16.mxu0 0
  %1547 = vmatpush1.bf16.msra.mxu0 0
  %1548 = vmatprep.subr.bf16.mxu0 0
  %1549 = vmatpush1.bf16.msra.mxu0 0
  %1550 = vmatprep.subr.bf16.mxu0 0
  %1551 = vmatpush1.bf16.msra.mxu0 0
  %1552 = vmatprep.subr.bf16.mxu0 0
  %1553 = vmatpush1.bf16.msra.mxu0 0
  %1554 = vmatprep.subr.bf16.mxu0 0
  %1555 = vmatpush1.bf16.msra.mxu0 %v447
  %1556 = vmatprep.subr.bf16.mxu0 0
  %1557 = vmatpush1.bf16.msra.mxu0 %v446
  %1558 = vmatprep.subr.bf16.mxu0 0
  %1559 = vmatpush2.bf16.msra.mxu0 0
  %1560 = vmatprep.subr.bf16.mxu0 0
  %1561 = vmatpush2.bf16.msra.mxu0 0
  %1562 = vmatprep.subr.bf16.mxu0 0
  %1563 = vmatpush2.bf16.msra.mxu0 0
  %1564 = vmatprep.subr.bf16.mxu0 0
  %1565 = vmatpush2.bf16.msra.mxu0 0
  %1566 = vmatprep.subr.bf16.mxu0 0
  %1567 = vmatpush2.bf16.msra.mxu0 0
  %1568 = vmatprep.subr.bf16.mxu0 0
  %1569 = vmatpush2.bf16.msra.mxu0 0
  %1570 = vmatprep.subr.bf16.mxu0 0
  %1571 = vmatpush2.bf16.msra.mxu0 0
  %1572 = vmatprep.subr.bf16.mxu0 0
  %1573 = vmatpush2.bf16.msra.mxu0 0
  %1574 = vmatprep.mubr.bf16.mxu0 0
  %1575 = vmatmul.mubr.bf16.gmra.mxu0 %v1432
  %v1576 = vpop.f32.mrf.mxu0
  %v1577 = vadd.f32 %v1537, %v1576
  %v1578 = vpop.f32.mrf.mxu0
  %v1579 = vpop.f32.mrf.mxu0
  %v1580 = vpop.f32.mrf.mxu0
  %1581 = vdwg.mxu0
  %v1582 = vadd.f32 %v1577, %v494
  %v1583 = vtanh.pop %v1582
  %v1584 = vmul.f32 %v1583, 0.5
  %v1585 = vadd.f32 %v1584, 0.5
  %v1586 = vmul.f32 %v1585, %v1415
  %1588 = vrot.lane.b32.xlu0 %v1583, 64
  %v1589 = vpop.permute.xlu0 %1588
  %v1591 = vmul.f32 %v1585, %v1589
  %1593 = vrot.lane.b32.xlu0 %v1591, 32
  %v1594 = vpop.permute.xlu0 %1593
  %v1596 = vadd.f32 %v1586, %v1594
  %v1597 = vtanh.pop %v1596
  %1599 = vrot.lane.b32.xlu0 %v1597, 64
  %v1600 = vpop.permute.xlu0 %1599
  %v1602 = vmul.f32 %v1585, %v1600
  %v1603 = vpack.c.bf16 %v1602, %v1602
  %1605 = vrot.lane.b32.xlu0 %v1602, 32
  %v1606 = vpop.permute.xlu0 %1605
  %1608 = vst.msk [vmem:[#allocation2 + $0x30] sm:$0xff] %vm252, %v1606
  %1610 = vrot.lane.b32.xlu0 %v1603, 32
  %v1611 = vpop.permute.xlu0 %1610
  %v1613 = vsel %vm252, %v1611, 0
  %1615 = vmatprep.subr.bf16.mxu0 0
  %1616 = vmatpush1.bf16.msra.mxu0 0
  %1617 = vmatprep.subr.bf16.mxu0 0
  %1618 = vmatpush1.bf16.msra.mxu0 0
  %1619 = vmatprep.subr.bf16.mxu0 0
  %1620 = vmatpush1.bf16.msra.mxu0 0
  %1621 = vmatprep.subr.bf16.mxu0 0
  %1622 = vmatpush1.bf16.msra.mxu0 0
  %1623 = vmatprep.subr.bf16.mxu0 0
  %1624 = vmatpush1.bf16.msra.mxu0 0
  %1625 = vmatprep.subr.bf16.mxu0 0
  %1626 = vmatpush1.bf16.msra.mxu0 0
  %1627 = vmatprep.subr.bf16.mxu0 0
  %1628 = vmatpush1.bf16.msra.mxu0 %v395
  %1629 = vmatprep.subr.bf16.mxu0 0
  %1630 = vmatpush1.bf16.msra.mxu0 %v394
  %1631 = vmatprep.subr.bf16.mxu0 0
  %1632 = vmatpush2.bf16.msra.mxu0 0
  %1633 = vmatprep.subr.bf16.mxu0 0
  %1634 = vmatpush2.bf16.msra.mxu0 0
  %1635 = vmatprep.subr.bf16.mxu0 0
  %1636 = vmatpush2.bf16.msra.mxu0 0
  %1637 = vmatprep.subr.bf16.mxu0 0
  %1638 = vmatpush2.bf16.msra.mxu0 0
  %1639 = vmatprep.subr.bf16.mxu0 0
  %1640 = vmatpush2.bf16.msra.mxu0 0
  %1641 = vmatprep.subr.bf16.mxu0 0
  %1642 = vmatpush2.bf16.msra.mxu0 0
  %1643 = vmatprep.subr.bf16.mxu0 0
  %1644 = vmatpush2.bf16.msra.mxu0 0
  %1645 = vmatprep.subr.bf16.mxu0 0
  %1646 = vmatpush2.bf16.msra.mxu0 0
  %1647 = vmatprep.mubr.bf16.mxu0 0
  %1648 = vmatmul.mubr.bf16.gmra.mxu0 %v1613
  %v1649 = vpop.f32.mrf.mxu0
  %v1650 = vadd.f32 0.0, %v1649
  %v1651 = vpop.f32.mrf.mxu0
  %v1652 = vpop.f32.mrf.mxu0
  %v1653 = vpop.f32.mrf.mxu0
  %1654 = vdwg.mxu0
  %1656 = vrot.lane.b32.xlu0 %v1495, 32
  %v1657 = vpop.permute.xlu0 %1656
  %v1659 = vsel %vm252, %v1657, 0
  %1661 = vmatprep.subr.bf16.mxu0 0
  %1662 = vmatpush1.bf16.msra.mxu0 0
  %1663 = vmatprep.subr.bf16.mxu0 0
  %1664 = vmatpush1.bf16.msra.mxu0 0
  %1665 = vmatprep.subr.bf16.mxu0 0
  %1666 = vmatpush1.bf16.msra.mxu0 0
  %1667 = vmatprep.subr.bf16.mxu0 0
  %1668 = vmatpush1.bf16.msra.mxu0 0
  %1669 = vmatprep.subr.bf16.mxu0 0
  %1670 = vmatpush1.bf16.msra.mxu0 0
  %1671 = vmatprep.subr.bf16.mxu0 0
  %1672 = vmatpush1.bf16.msra.mxu0 0
  %1673 = vmatprep.subr.bf16.mxu0 0
  %1674 = vmatpush1.bf16.msra.mxu0 %v447
  %1675 = vmatprep.subr.bf16.mxu0 0
  %1676 = vmatpush1.bf16.msra.mxu0 %v446
  %1677 = vmatprep.subr.bf16.mxu0 0
  %1678 = vmatpush2.bf16.msra.mxu0 0
  %1679 = vmatprep.subr.bf16.mxu0 0
  %1680 = vmatpush2.bf16.msra.mxu0 0
  %1681 = vmatprep.subr.bf16.mxu0 0
  %1682 = vmatpush2.bf16.msra.mxu0 0
  %1683 = vmatprep.subr.bf16.mxu0 0
  %1684 = vmatpush2.bf16.msra.mxu0 0
  %1685 = vmatprep.subr.bf16.mxu0 0
  %1686 = vmatpush2.bf16.msra.mxu0 0
  %1687 = vmatprep.subr.bf16.mxu0 0
  %1688 = vmatpush2.bf16.msra.mxu0 0
  %1689 = vmatprep.subr.bf16.mxu0 0
  %1690 = vmatpush2.bf16.msra.mxu0 0
  %1691 = vmatprep.subr.bf16.mxu0 0
  %1692 = vmatpush2.bf16.msra.mxu0 0
  %1693 = vmatprep.mubr.bf16.mxu0 0
  %1694 = vmatmul.mubr.bf16.gmra.mxu0 %v1659
  %v1695 = vpop.f32.mrf.mxu0
  %v1696 = vadd.f32 %v1650, %v1695
  %v1697 = vpop.f32.mrf.mxu0
  %v1698 = vpop.f32.mrf.mxu0
  %v1699 = vpop.f32.mrf.mxu0
  %1700 = vdwg.mxu0
  %v1701 = vadd.f32 %v1696, %v494
  %v1702 = vtanh.pop %v1701
  %v1703 = vmul.f32 %v1702, 0.5
  %v1704 = vadd.f32 %v1703, 0.5
  %v1705 = vmul.f32 %v1704, %v1596
  %1707 = vrot.lane.b32.xlu0 %v1702, 64
  %v1708 = vpop.permute.xlu0 %1707
  %v1710 = vmul.f32 %v1704, %v1708
  %1712 = vrot.lane.b32.xlu0 %v1710, 32
  %v1713 = vpop.permute.xlu0 %1712
  %v1715 = vadd.f32 %v1705, %v1713
  %v1716 = vtanh.pop %v1715
  %1718 = vrot.lane.b32.xlu0 %v1716, 64
  %v1719 = vpop.permute.xlu0 %1718
  %v1721 = vmul.f32 %v1704, %v1719
  %1723 = vrot.lane.b32.xlu0 %v1721, 32
  %v1724 = vpop.permute.xlu0 %1723
  %1726 = vst.msk [vmem:[#allocation2 + $0x38] sm:$0xff] %vm252, %v1724
  %1728 = vrot.lane.b32.xlu0 %v1494, 32
  %v1729 = vpop.permute.xlu0 %1728
  %1731 = vst.msk [vmem:[%s12] sm:$0xff] %vm252, %v1729
  %1733 = vrot.lane.b32.xlu0 %v1488, 96
  %v1734 = vpop.permute.xlu0 %1733
  %1736 = vst.msk [vmem:[%s13] sm:$0xff] %vm252, %v1734
  %1737 = vst.msk [vmem:[%s12 + $0x8] sm:$0xff] %vm252, %v1724
  %1739 = vrot.lane.b32.xlu0 %v1715, 96
  %v1740 = vpop.permute.xlu0 %1739
  %1742 = vst.msk [vmem:[%s13 + $0x8] sm:$0xff] %vm252, %v1740
  %v1743 = vld [vmem:[#allocation2] sm:$0xff]
  %v1744 = vld [vmem:[#allocation2 + $0x8] sm:$0xff]
  %v1745 = vld [vmem:[#allocation2 + $0x10] sm:$0xff]
  %v1746 = vld [vmem:[#allocation2 + $0x18] sm:$0xff]
  %v1747 = vld [vmem:[#allocation2 + $0x20] sm:$0xff]
  %v1748 = vld [vmem:[#allocation2 + $0x28] sm:$0xff]
  %v1749 = vld [vmem:[#allocation2 + $0x30] sm:$0xff]
  %v1750 = vld [vmem:[#allocation2 + $0x38] sm:$0xff]
  %v1751 = vld [vmem:[%s9] sm:$0x1]
  %v1753 = vlaneseq
  %v1754 = vshrl.u32 %v1753, 7
  %v1755 = vsub.s32 0, %v1754
  %v1756 = vrot.slane %v1751, %v1755
  %v1758 = vmul.f32 %v1743, %v1756
  %v1759 = vmul.f32 %v1744, %v1756
  %v1760 = vmul.f32 %v1745, %v1756
  %v1761 = vmul.f32 %v1746, %v1756
  %v1762 = vmul.f32 %v1747, %v1756
  %v1763 = vmul.f32 %v1748, %v1756
  %v1764 = vmul.f32 %v1749, %v1756
  %v1765 = vmul.f32 %v1750, %v1756
  %v1766 = vsel %vm252, %v1758, 0.0
  %1767 = vadd.xlane.f32.xlu0 %v1766
  %v1768 = vpop.xlane.xlu0 %1767
  %v1769 = vsel %vm252, %v1759, 0.0
  %1770 = vadd.xlane.f32.xlu0 %v1769
  %v1771 = vpop.xlane.xlu0 %1770
  %v1772 = vsel %vm252, %v1760, 0.0
  %1773 = vadd.xlane.f32.xlu0 %v1772
  %v1774 = vpop.xlane.xlu0 %1773
  %v1775 = vsel %vm252, %v1761, 0.0
  %1776 = vadd.xlane.f32.xlu0 %v1775
  %v1777 = vpop.xlane.xlu0 %1776
  %v1778 = vsel %vm252, %v1762, 0.0
  %1779 = vadd.xlane.f32.xlu0 %v1778
  %v1780 = vpop.xlane.xlu0 %1779
  %v1781 = vsel %vm252, %v1763, 0.0
  %1782 = vadd.xlane.f32.xlu0 %v1781
  %v1783 = vpop.xlane.xlu0 %1782
  %v1784 = vsel %vm252, %v1764, 0.0
  %1785 = vadd.xlane.f32.xlu0 %v1784
  %v1786 = vpop.xlane.xlu0 %1785
  %v1787 = vsel %vm252, %v1765, 0.0
  %1788 = vadd.xlane.f32.xlu0 %v1787
  %v1789 = vpop.xlane.xlu0 %1788
  %v1790 = vld [vmem:[#allocation3] sm:$0x1]
  %v1792 = vlaneseq
  %v1793 = vshrl.u32 %v1792, 7
  %v1794 = vsub.s32 0, %v1793
  %v1795 = vrot.slane %v1790, %v1794
  %v1797 = vadd.f32 %v1768, %v1795
  %v1798 = vadd.f32 %v1771, %v1795
  %v1799 = vadd.f32 %v1774, %v1795
  %v1800 = vadd.f32 %v1777, %v1795
  %v1801 = vadd.f32 %v1780, %v1795
  %v1802 = vadd.f32 %v1783, %v1795
  %v1803 = vadd.f32 %v1786, %v1795
  %v1804 = vadd.f32 %v1789, %v1795
  %v1805 = vtanh.pop %v1797
  %v1806 = vtanh.pop %v1798
  %v1807 = vtanh.pop %v1799
  %v1808 = vtanh.pop %v1800
  %v1809 = vtanh.pop %v1801
  %v1810 = vtanh.pop %v1802
  %v1811 = vtanh.pop %v1803
  %v1812 = vtanh.pop %v1804
  %vm1813 = vcmask 7168
  %1814 = vst.msk [vmem:[%s11] sm:$0xff] %vm1813, %v1805
  %1815 = vst.msk [vmem:[%s11 + $0x8] sm:$0xff] %vm1813, %v1806
  %1816 = vst.msk [vmem:[%s11 + $0x10] sm:$0xff] %vm1813, %v1807
  %1817 = vst.msk [vmem:[%s11 + $0x18] sm:$0xff] %vm1813, %v1808
  %1818 = vst.msk [vmem:[%s11 + $0x20] sm:$0xff] %vm1813, %v1809
  %1819 = vst.msk [vmem:[%s11 + $0x28] sm:$0xff] %vm1813, %v1810
  %1820 = vst.msk [vmem:[%s11 + $0x30] sm:$0xff] %vm1813, %v1811
  %1821 = vst.msk [vmem:[%s11 + $0x38] sm:$0xff] %vm1813, %v1812
  // Predicated region
  $region46: #{lstm_model_forward.1} parent=0 // pred_check
    _
  $region47: #{lstm_model_forward.1} parent=0 // pred_check_branch
    %1823 = sbr.rel (0) target = $region49
  $region48: #{lstm_model_forward.1} parent=0 // pred_region
    _
  $region49: #{lstm_model_forward.1} parent=0 // pred_fallthru
    _
  // Predicated region
  $region50: #{lstm_model_forward.1} parent=0 // pred_check
    _
  $region51: #{lstm_model_forward.1} parent=0 // pred_check_branch
    %1825 = sbr.rel (0) target = $region53
  $region52: #{lstm_model_forward.1} parent=0 // pred_region
    _
  $region53: #{lstm_model_forward.1} parent=0 // pred_fallthru
    _
  // Predicated region
  $region54: #{lstm_model_forward.1} parent=0 // pred_check
    _
  $region55: #{lstm_model_forward.1} parent=0 // pred_check_branch
    %1827 = sbr.rel (0) target = $region57
  $region56: #{lstm_model_forward.1} parent=0 // pred_region
    _
  $region57: #{lstm_model_forward.1} parent=0 // pred_fallthru
    _
  // Predicated region
  $region58: #{lstm_model_forward.1} parent=0 // pred_check
    _
  $region59: #{lstm_model_forward.1} parent=0 // pred_check_branch
    %1829 = sbr.rel (0) target = $region61
  $region60: #{lstm_model_forward.1} parent=0 // pred_region
    _
  $region61: #{lstm_model_forward.1} parent=0 // pred_fallthru
    _
  // Predicated region
  $region62: #{lstm_model_forward.1} parent=0 // pred_check
    _
  $region63: #{lstm_model_forward.1} parent=0 // pred_check_branch
    %1831 = sbr.rel (0) target = $region65
  $region64: #{lstm_model_forward.1} parent=0 // pred_region
    _
  $region65: #{lstm_model_forward.1} parent=0 // pred_fallthru
    _
  // Predicated region
  $region66: #{lstm_model_forward.1} parent=0 // pred_check
    _
  $region67: #{lstm_model_forward.1} parent=0 // pred_check_branch
    %1833 = sbr.rel (0) target = $region69
  $region68: #{lstm_model_forward.1} parent=0 // pred_region
    _
  $region69: #{lstm_model_forward.1} parent=0 // pred_fallthru
    _

</llo_original>
